<compile_context>
chip_gen: v6e
topology: v6e:2x2x1
jax: 0.10.0
libtpu: 0.0.40
codegen_flags: <defaults>
</compile_context>

<pallas_src>
import math

import jax
import jax.numpy as jnp
from jax.experimental import pallas as pl
from jax.experimental.pallas import tpu as pltpu  # noqa: F401  (TPU backend)


def _round_up(x, m):
    return ((x + m - 1) // m) * m


# --------------------------------------------------------------------------
# Fused decode-step kernel: L stacked LSTM cells + output projection.
# --------------------------------------------------------------------------
def decoder_step_kernel(x_ref, h_in_ref, c_in_ref,
                        w_ih_ref, w_hh_ref, b_ref,
                        fc_w_ref, fc_b_ref,
                        pred_ref, h_out_ref, c_out_ref):
    """One decode step, everything VMEM-resident.

    x_ref:    (Bp, Dp)      f32  embedded input (zero-padded)
    h_in_ref: (L, Bp, Hp)   f32  previous hidden (aliased with h_out_ref in HBM)
    c_in_ref: (L, Bp, Hp)   f32  previous cell   (aliased with c_out_ref in HBM)
    w_ih_ref: (L, Dp, 4Hp)  bf16 input->hidden weights, transposed, gate-padded
    w_hh_ref: (L, Hp, 4Hp)  bf16 hidden->hidden weights, transposed, gate-padded
    b_ref:    (L, 1, 4Hp)   f32  b_ih + b_hh, gate-padded
    fc_w_ref: (Hp, Vp)      bf16 fc_out weight, transposed, zero-padded
    fc_b_ref: (1, Vp)       f32  fc_out bias, zero-padded
    pred_ref: (Bp, Vp)      f32  logits (lane-dense)
    h_out_ref, c_out_ref: (L, Bp, Hp) f32 new states
    """
    num_layers = h_in_ref.shape[0]
    hp = h_in_ref.shape[-1]
    dp = w_ih_ref.shape[1]

    layer_in = x_ref[...]                                   # (Bp, Dp) f32
    for l in range(num_layers):                             # unrolled, L is static
        h_prev = h_in_ref[l]                                # (Bp, Hp) f32
        c_prev = c_in_ref[l]                                # (Bp, Hp) f32
        w_ih = w_ih_ref[l]                                  # (Dp, 4Hp) bf16
        if l > 0 and dp != hp:
            # layers > 0 take an H-wide input; drop the extra (zero) rows
            w_ih = w_ih[:hp, :]
        w_hh = w_hh_ref[l]                                  # (Hp, 4Hp) bf16

        # MXU dots in bf16, f32 accumulation; gate layout [i | f | g | o],
        # each gate occupying a full Hp (=128-multiple) lane block.
        gates = (jnp.dot(layer_in.astype(w_ih.dtype), w_ih,
                         preferred_element_type=jnp.float32)
                 + jnp.dot(h_prev.astype(w_hh.dtype), w_hh,
                           preferred_element_type=jnp.float32)
                 + b_ref[l])                                # (Bp, 4Hp) f32

        i_g = jax.nn.sigmoid(gates[:, 0 * hp:1 * hp])
        f_g = jax.nn.sigmoid(gates[:, 1 * hp:2 * hp])
        g_g = jnp.tanh(gates[:, 2 * hp:3 * hp])
        o_g = jax.nn.sigmoid(gates[:, 3 * hp:4 * hp])

        c_new = f_g * c_prev + i_g * g_g                    # (Bp, Hp) f32
        h_new = o_g * jnp.tanh(c_new)

        h_out_ref[l] = h_new
        c_out_ref[l] = c_new
        layer_in = h_new                                    # feeds next layer

    fc_w = fc_w_ref[...]                                    # (Hp, Vp) bf16
    pred_ref[...] = (jnp.dot(layer_in.astype(fc_w.dtype), fc_w,
                             preferred_element_type=jnp.float32)
                     + fc_b_ref[...])                       # (Bp, Vp) f32


# --------------------------------------------------------------------------
# Wrappers
# --------------------------------------------------------------------------
def fused_decoder_step(params, x_pad, hidden_p, cell_p):
    """x_pad: (Bp, Dp) f32; hidden_p/cell_p: (L, Bp, Hp) f32 (padded)."""
    num_layers, bp, hp = hidden_p.shape
    vp = params["fc_w_t"].shape[-1]
    return pl.pallas_call(
        decoder_step_kernel,
        out_shape=(
            jax.ShapeDtypeStruct((bp, vp), jnp.float32),           # logits
            jax.ShapeDtypeStruct((num_layers, bp, hp), jnp.float32),  # hidden
            jax.ShapeDtypeStruct((num_layers, bp, hp), jnp.float32),  # cell
        ),
        # In-place state update (P8): hidden -> hidden_out, cell -> cell_out.
        input_output_aliases={1: 1, 2: 2},
    )(x_pad, hidden_p, cell_p,
      params["w_ih_t"], params["w_hh_t"], params["b"],
      params["fc_w_t"], params["fc_b"])


def rnn_decoder_forward(params, tokens, hidden, cell):
    """Module-equivalent API: replicates RNNDecoder.forward (dropout=0.0).

    tokens: (B,) int32; hidden, cell: (L, B, H) float32
    returns (prediction (B, V), (hidden (L, B, H), cell (L, B, H)))
    """
    batch = tokens.shape[0]
    num_layers, _, hid = hidden.shape
    vocab = params["embedding"].shape[0]
    hp = params["w_hh_t"].shape[1]
    dp = params["w_ih_t"].shape[1]
    bp = _round_up(batch, 8)

    # Embedding lookup (plain-JAX glue; table is pre-padded to width Dp).
    tokens_p = jnp.pad(tokens, (0, bp - batch))
    x = jnp.take(params["embedding"], tokens_p, axis=0)     # (Bp, Dp) f32
    assert x.shape == (bp, dp)

    hidden_p = jnp.pad(hidden, ((0, 0), (0, bp - batch), (0, hp - hid)))
    cell_p = jnp.pad(cell, ((0, 0), (0, bp - batch), (0, hp - hid)))

    pred_p, h_p, c_p = fused_decoder_step(params, x, hidden_p, cell_p)

    prediction = pred_p[:batch, :vocab]
    new_hidden = h_p[:, :batch, :hid]
    new_cell = c_p[:, :batch, :hid]
    return prediction, (new_hidden, new_cell)


# --------------------------------------------------------------------------
# Parameter construction: PyTorch-default init, then pack / pad / stack.
# --------------------------------------------------------------------------
def init_params(key, vocab_size, embed_dim, hidden_size, num_layers,
                weights_dtype=jnp.bfloat16):
    """weights_dtype=jnp.float32 gives exact f32 parity with the PyTorch module;
    bf16 (default) halves weight DMA traffic, with f32 MXU accumulation."""
    H, E, V, L = hidden_size, embed_dim, vocab_size, num_layers
    Hp = _round_up(H, 128)
    Ep = _round_up(E, 128)
    Dp = max(Ep, Hp)
    Vp = _round_up(V, 128)

    k = 1.0 / math.sqrt(H)
    keys = jax.random.split(key, 1 + 4 * L + 2)
    ki = iter(keys)

    # Embedding ~ N(0,1), padded to Dp lanes (zero pad).
    emb = jax.random.normal(next(ki), (V, E), jnp.float32)
    emb = jnp.pad(emb, ((0, 0), (0, Dp - E)))

    def pack_w(w, rows_p):
        # w: (4H, d_in) PyTorch layout -> (rows_p, 4*Hp), transposed and
        # gate-wise padded (gate order i, f, g, o preserved; padding is zero).
        d_in = w.shape[1]
        wt = w.T.reshape(d_in, 4, H)
        wt = jnp.pad(wt, ((0, rows_p - d_in), (0, 0), (0, Hp - H)))
        return wt.reshape(rows_p, 4 * Hp)

    def pack_b(b):
        bb = b.reshape(4, H)
        bb = jnp.pad(bb, ((0, 0), (0, Hp - H)))
        return bb.reshape(1, 4 * Hp)

    w_ih_l, w_hh_l, b_l = [], [], []
    for l in range(L):
        d_in = E if l == 0 else H
        w_ih = jax.random.uniform(next(ki), (4 * H, d_in), jnp.float32, -k, k)
        w_hh = jax.random.uniform(next(ki), (4 * H, H), jnp.float32, -k, k)
        b_ih = jax.random.uniform(next(ki), (4 * H,), jnp.float32, -k, k)
        b_hh = jax.random.uniform(next(ki), (4 * H,), jnp.float32, -k, k)
        w_ih_l.append(pack_w(w_ih, Dp))             # (Dp, 4Hp)
        w_hh_l.append(pack_w(w_hh, Hp))             # (Hp, 4Hp)
        b_l.append(pack_b(b_ih + b_hh))             # (1, 4Hp)

    fc_w = jax.random.uniform(next(ki), (V, H), jnp.float32, -k, k)
    fc_b = jax.random.uniform(next(ki), (V,), jnp.float32, -k, k)
    fc_w_t = jnp.pad(fc_w.T, ((0, Hp - H), (0, Vp - V)))    # (Hp, Vp)
    fc_b_p = jnp.pad(fc_b, (0, Vp - V)).reshape(1, Vp)      # (1, Vp)

    return {
        "embedding": emb,                                        # (V, Dp) f32
        "w_ih_t": jnp.stack(w_ih_l).astype(weights_dtype),       # (L, Dp, 4Hp)
        "w_hh_t": jnp.stack(w_hh_l).astype(weights_dtype),       # (L, Hp, 4Hp)
        "b": jnp.stack(b_l),                                     # (L, 1, 4Hp) f32
        "fc_w_t": fc_w_t.astype(weights_dtype),                  # (Hp, Vp)
        "fc_b": fc_b_p,                                          # (1, Vp) f32
    }


# --------------------------------------------------------------------------
if __name__ == "__main__":
    vocab_size = 50
    embed_dim = 32
    hidden_size = 32
    num_layers = 2
    batch = 4

    root = jax.random.PRNGKey(0)
    k_params, k_tok, k_h, k_c = jax.random.split(root, 4)

    params = init_params(k_params, vocab_size, embed_dim, hidden_size,
                         num_layers)

    tokens = jax.random.randint(k_tok, (batch,), 0, vocab_size, jnp.int32)
    hidden = jax.random.normal(k_h, (num_layers, batch, hidden_size),
                               jnp.float32)
    cell = jax.random.normal(k_c, (num_layers, batch, hidden_size),
                             jnp.float32)

    fwd = jax.jit(rnn_decoder_forward)

    prediction, (new_hidden, new_cell) = fwd(params, tokens, hidden, cell)
    jax.block_until_ready((prediction, new_hidden, new_cell))

    assert prediction.shape == (batch, vocab_size)
    assert new_hidden.shape == (num_layers, batch, hidden_size)
    assert new_cell.shape == (num_layers, batch, hidden_size)
    assert bool(jnp.all(jnp.isfinite(prediction)))

    # Short greedy decode loop (RNNSeq2Seq with teacher_forcing_ratio = 0):
    # argmax of the logits feeds back as the next input token.
    tok, h, c = tokens, new_hidden, new_cell
    for _ in range(3):
        logits, (h, c) = fwd(params, tok, h, c)
        tok = jnp.argmax(logits, axis=-1).astype(jnp.int32)
    jax.block_until_ready((tok, h, c))

    print("KERNEL_OK")
</pallas_src>

<mosaic_0001>
module attributes {stable_mosaic.version = 11 : i64} {
  func.func @decoder_step_kernel(%arg0: memref<8x128xf32, #tpu.memory_space<vmem>>, %arg1: memref<2x8x128xf32, #tpu.memory_space<vmem>>, %arg2: memref<2x8x128xf32, #tpu.memory_space<vmem>>, %arg3: memref<2x128x512xbf16, #tpu.memory_space<vmem>>, %arg4: memref<2x128x512xbf16, #tpu.memory_space<vmem>>, %arg5: memref<2x1x512xf32, #tpu.memory_space<vmem>>, %arg6: memref<128x128xbf16, #tpu.memory_space<vmem>>, %arg7: memref<1x128xf32, #tpu.memory_space<vmem>>, %arg8: memref<8x128xf32, #tpu.memory_space<vmem>>, %arg9: memref<2x8x128xf32, #tpu.memory_space<vmem>>, %arg10: memref<2x8x128xf32, #tpu.memory_space<vmem>>) attributes {dimension_semantics = [], scalar_prefetch = 0 : i64, scratch_operands = 0 : i64, tpu.core_type = #tpu.core_type<tc>} {
    %c0 = arith.constant 0 : index
    %c0_0 = arith.constant 0 : index
    %0 = vector.load %arg0[%c0, %c0_0] : memref<8x128xf32, #tpu.memory_space<vmem>>, vector<8x128xf32>
    %c0_1 = arith.constant 0 : index
    %c0_2 = arith.constant 0 : index
    %c0_3 = arith.constant 0 : index
    %1 = vector.load %arg1[%c0_1, %c0_2, %c0_3] : memref<2x8x128xf32, #tpu.memory_space<vmem>>, vector<1x8x128xf32>
    %2 = vector.shape_cast %1 : vector<1x8x128xf32> to vector<8x128xf32>
    %c0_4 = arith.constant 0 : index
    %c0_5 = arith.constant 0 : index
    %c0_6 = arith.constant 0 : index
    %3 = vector.load %arg2[%c0_4, %c0_5, %c0_6] : memref<2x8x128xf32, #tpu.memory_space<vmem>>, vector<1x8x128xf32>
    %4 = vector.shape_cast %3 : vector<1x8x128xf32> to vector<8x128xf32>
    %c0_7 = arith.constant 0 : index
    %c0_8 = arith.constant 0 : index
    %c0_9 = arith.constant 0 : index
    %5 = vector.load %arg3[%c0_7, %c0_8, %c0_9] : memref<2x128x512xbf16, #tpu.memory_space<vmem>>, vector<1x128x512xbf16>
    %6 = vector.shape_cast %5 : vector<1x128x512xbf16> to vector<128x512xbf16>
    %c0_10 = arith.constant 0 : index
    %c0_11 = arith.constant 0 : index
    %c0_12 = arith.constant 0 : index
    %7 = vector.load %arg4[%c0_10, %c0_11, %c0_12] : memref<2x128x512xbf16, #tpu.memory_space<vmem>>, vector<1x128x512xbf16>
    %8 = vector.shape_cast %7 : vector<1x128x512xbf16> to vector<128x512xbf16>
    %9 = arith.truncf %0 : vector<8x128xf32> to vector<8x128xbf16>
    %cst = arith.constant dense<0.000000e+00> : vector<8x512xf32>
    %10 = tpu.matmul %9, %6, %cst {dimension_numbers = #tpu.dot_dimension_numbers<[1], [0], [0], [1], [0, 0, 1, 1], [], []>} : vector<8x128xbf16>, vector<128x512xbf16>, vector<8x512xf32> -> vector<8x512xf32>
    %11 = arith.truncf %2 : vector<8x128xf32> to vector<8x128xbf16>
    %cst_13 = arith.constant dense<0.000000e+00> : vector<8x512xf32>
    %12 = tpu.matmul %11, %8, %cst_13 {dimension_numbers = #tpu.dot_dimension_numbers<[1], [0], [0], [1], [0, 0, 1, 1], [], []>} : vector<8x128xbf16>, vector<128x512xbf16>, vector<8x512xf32> -> vector<8x512xf32>
    %13 = arith.addf %10, %12 : vector<8x512xf32>
    %c0_14 = arith.constant 0 : index
    %c0_15 = arith.constant 0 : index
    %c0_16 = arith.constant 0 : index
    %14 = vector.load %arg5[%c0_14, %c0_15, %c0_16] : memref<2x1x512xf32, #tpu.memory_space<vmem>>, vector<1x1x512xf32>
    %15 = vector.shape_cast %14 : vector<1x1x512xf32> to vector<1x512xf32>
    %16 = vector.broadcast %15 : vector<1x512xf32> to vector<8x512xf32>
    %17 = arith.addf %13, %16 : vector<8x512xf32>
    %18 = vector.extract_strided_slice %17 {offsets = [0, 0], sizes = [8, 128], strides = [1, 1]} : vector<8x512xf32> to vector<8x128xf32>
    %19 = arith.negf %18 : vector<8x128xf32>
    %20 = math.exp %19 : vector<8x128xf32>
    %cst_17 = arith.constant 1.000000e+00 : f32
    %21 = vector.broadcast %cst_17 : f32 to vector<8x128xf32>
    %22 = arith.addf %21, %20 : vector<8x128xf32>
    %23 = arith.divf %21, %22 : vector<8x128xf32>
    %24 = vector.extract_strided_slice %17 {offsets = [0, 128], sizes = [8, 128], strides = [1, 1]} : vector<8x512xf32> to vector<8x128xf32>
    %25 = arith.negf %24 : vector<8x128xf32>
    %26 = math.exp %25 : vector<8x128xf32>
    %cst_18 = arith.constant 1.000000e+00 : f32
    %27 = vector.broadcast %cst_18 : f32 to vector<8x128xf32>
    %28 = arith.addf %27, %26 : vector<8x128xf32>
    %29 = arith.divf %27, %28 : vector<8x128xf32>
    %30 = vector.extract_strided_slice %17 {offsets = [0, 256], sizes = [8, 128], strides = [1, 1]} : vector<8x512xf32> to vector<8x128xf32>
    %31 = math.tanh %30 : vector<8x128xf32>
    %32 = vector.extract_strided_slice %17 {offsets = [0, 384], sizes = [8, 128], strides = [1, 1]} : vector<8x512xf32> to vector<8x128xf32>
    %33 = arith.negf %32 : vector<8x128xf32>
    %34 = math.exp %33 : vector<8x128xf32>
    %cst_19 = arith.constant 1.000000e+00 : f32
    %35 = vector.broadcast %cst_19 : f32 to vector<8x128xf32>
    %36 = arith.addf %35, %34 : vector<8x128xf32>
    %37 = arith.divf %35, %36 : vector<8x128xf32>
    %38 = arith.mulf %29, %4 : vector<8x128xf32>
    %39 = arith.mulf %23, %31 : vector<8x128xf32>
    %40 = arith.addf %38, %39 : vector<8x128xf32>
    %41 = math.tanh %40 : vector<8x128xf32>
    %42 = arith.mulf %37, %41 : vector<8x128xf32>
    %c0_20 = arith.constant 0 : index
    %c0_21 = arith.constant 0 : index
    %c0_22 = arith.constant 0 : index
    %43 = vector.load %arg9[%c0_20, %c0_21, %c0_22] : memref<2x8x128xf32, #tpu.memory_space<vmem>>, vector<1x8x128xf32>
    %44 = vector.shape_cast %43 : vector<1x8x128xf32> to vector<8x128xf32>
    %45 = vector.shape_cast %42 : vector<8x128xf32> to vector<1x8x128xf32>
    tpu.vector_store %arg9[%c0_20, %c0_21, %c0_22], %45 {strides = array<i32>} : memref<2x8x128xf32, #tpu.memory_space<vmem>>, vector<1x8x128xf32>,
    %c0_23 = arith.constant 0 : index
    %c0_24 = arith.constant 0 : index
    %c0_25 = arith.constant 0 : index
    %46 = vector.load %arg10[%c0_23, %c0_24, %c0_25] : memref<2x8x128xf32, #tpu.memory_space<vmem>>, vector<1x8x128xf32>
    %47 = vector.shape_cast %46 : vector<1x8x128xf32> to vector<8x128xf32>
    %48 = vector.shape_cast %40 : vector<8x128xf32> to vector<1x8x128xf32>
    tpu.vector_store %arg10[%c0_23, %c0_24, %c0_25], %48 {strides = array<i32>} : memref<2x8x128xf32, #tpu.memory_space<vmem>>, vector<1x8x128xf32>,
    %c1 = arith.constant 1 : index
    %c0_26 = arith.constant 0 : index
    %c0_27 = arith.constant 0 : index
    %49 = vector.load %arg1[%c1, %c0_26, %c0_27] : memref<2x8x128xf32, #tpu.memory_space<vmem>>, vector<1x8x128xf32>
    %50 = vector.shape_cast %49 : vector<1x8x128xf32> to vector<8x128xf32>
    %c1_28 = arith.constant 1 : index
    %c0_29 = arith.constant 0 : index
    %c0_30 = arith.constant 0 : index
    %51 = vector.load %arg2[%c1_28, %c0_29, %c0_30] : memref<2x8x128xf32, #tpu.memory_space<vmem>>, vector<1x8x128xf32>
    %52 = vector.shape_cast %51 : vector<1x8x128xf32> to vector<8x128xf32>
    %c1_31 = arith.constant 1 : index
    %c0_32 = arith.constant 0 : index
    %c0_33 = arith.constant 0 : index
    %53 = vector.load %arg3[%c1_31, %c0_32, %c0_33] : memref<2x128x512xbf16, #tpu.memory_space<vmem>>, vector<1x128x512xbf16>
    %54 = vector.shape_cast %53 : vector<1x128x512xbf16> to vector<128x512xbf16>
    %c1_34 = arith.constant 1 : index
    %c0_35 = arith.constant 0 : index
    %c0_36 = arith.constant 0 : index
    %55 = vector.load %arg4[%c1_34, %c0_35, %c0_36] : memref<2x128x512xbf16, #tpu.memory_space<vmem>>, vector<1x128x512xbf16>
    %56 = vector.shape_cast %55 : vector<1x128x512xbf16> to vector<128x512xbf16>
    %57 = arith.truncf %42 : vector<8x128xf32> to vector<8x128xbf16>
    %cst_37 = arith.constant dense<0.000000e+00> : vector<8x512xf32>
    %58 = tpu.matmul %57, %54, %cst_37 {dimension_numbers = #tpu.dot_dimension_numbers<[1], [0], [0], [1], [0, 0, 1, 1], [], []>} : vector<8x128xbf16>, vector<128x512xbf16>, vector<8x512xf32> -> vector<8x512xf32>
    %59 = arith.truncf %50 : vector<8x128xf32> to vector<8x128xbf16>
    %cst_38 = arith.constant dense<0.000000e+00> : vector<8x512xf32>
    %60 = tpu.matmul %59, %56, %cst_38 {dimension_numbers = #tpu.dot_dimension_numbers<[1], [0], [0], [1], [0, 0, 1, 1], [], []>} : vector<8x128xbf16>, vector<128x512xbf16>, vector<8x512xf32> -> vector<8x512xf32>
    %61 = arith.addf %58, %60 : vector<8x512xf32>
    %c1_39 = arith.constant 1 : index
    %c0_40 = arith.constant 0 : index
    %c0_41 = arith.constant 0 : index
    %62 = vector.load %arg5[%c1_39, %c0_40, %c0_41] : memref<2x1x512xf32, #tpu.memory_space<vmem>>, vector<1x1x512xf32>
    %63 = vector.shape_cast %62 : vector<1x1x512xf32> to vector<1x512xf32>
    %64 = vector.broadcast %63 : vector<1x512xf32> to vector<8x512xf32>
    %65 = arith.addf %61, %64 : vector<8x512xf32>
    %66 = vector.extract_strided_slice %65 {offsets = [0, 0], sizes = [8, 128], strides = [1, 1]} : vector<8x512xf32> to vector<8x128xf32>
    %67 = arith.negf %66 : vector<8x128xf32>
    %68 = math.exp %67 : vector<8x128xf32>
    %cst_42 = arith.constant 1.000000e+00 : f32
    %69 = vector.broadcast %cst_42 : f32 to vector<8x128xf32>
    %70 = arith.addf %69, %68 : vector<8x128xf32>
    %71 = arith.divf %69, %70 : vector<8x128xf32>
    %72 = vector.extract_strided_slice %65 {offsets = [0, 128], sizes = [8, 128], strides = [1, 1]} : vector<8x512xf32> to vector<8x128xf32>
    %73 = arith.negf %72 : vector<8x128xf32>
    %74 = math.exp %73 : vector<8x128xf32>
    %cst_43 = arith.constant 1.000000e+00 : f32
    %75 = vector.broadcast %cst_43 : f32 to vector<8x128xf32>
    %76 = arith.addf %75, %74 : vector<8x128xf32>
    %77 = arith.divf %75, %76 : vector<8x128xf32>
    %78 = vector.extract_strided_slice %65 {offsets = [0, 256], sizes = [8, 128], strides = [1, 1]} : vector<8x512xf32> to vector<8x128xf32>
    %79 = math.tanh %78 : vector<8x128xf32>
    %80 = vector.extract_strided_slice %65 {offsets = [0, 384], sizes = [8, 128], strides = [1, 1]} : vector<8x512xf32> to vector<8x128xf32>
    %81 = arith.negf %80 : vector<8x128xf32>
    %82 = math.exp %81 : vector<8x128xf32>
    %cst_44 = arith.constant 1.000000e+00 : f32
    %83 = vector.broadcast %cst_44 : f32 to vector<8x128xf32>
    %84 = arith.addf %83, %82 : vector<8x128xf32>
    %85 = arith.divf %83, %84 : vector<8x128xf32>
    %86 = arith.mulf %77, %52 : vector<8x128xf32>
    %87 = arith.mulf %71, %79 : vector<8x128xf32>
    %88 = arith.addf %86, %87 : vector<8x128xf32>
    %89 = math.tanh %88 : vector<8x128xf32>
    %90 = arith.mulf %85, %89 : vector<8x128xf32>
    %c1_45 = arith.constant 1 : index
    %c0_46 = arith.constant 0 : index
    %c0_47 = arith.constant 0 : index
    %91 = vector.load %arg9[%c1_45, %c0_46, %c0_47] : memref<2x8x128xf32, #tpu.memory_space<vmem>>, vector<1x8x128xf32>
    %92 = vector.shape_cast %91 : vector<1x8x128xf32> to vector<8x128xf32>
    %93 = vector.shape_cast %90 : vector<8x128xf32> to vector<1x8x128xf32>
    tpu.vector_store %arg9[%c1_45, %c0_46, %c0_47], %93 {strides = array<i32>} : memref<2x8x128xf32, #tpu.memory_space<vmem>>, vector<1x8x128xf32>,
    %c1_48 = arith.constant 1 : index
    %c0_49 = arith.constant 0 : index
    %c0_50 = arith.constant 0 : index
    %94 = vector.load %arg10[%c1_48, %c0_49, %c0_50] : memref<2x8x128xf32, #tpu.memory_space<vmem>>, vector<1x8x128xf32>
    %95 = vector.shape_cast %94 : vector<1x8x128xf32> to vector<8x128xf32>
    %96 = vector.shape_cast %88 : vector<8x128xf32> to vector<1x8x128xf32>
    tpu.vector_store %arg10[%c1_48, %c0_49, %c0_50], %96 {strides = array<i32>} : memref<2x8x128xf32, #tpu.memory_space<vmem>>, vector<1x8x128xf32>,
    %c0_51 = arith.constant 0 : index
    %c0_52 = arith.constant 0 : index
    %97 = vector.load %arg6[%c0_51, %c0_52] : memref<128x128xbf16, #tpu.memory_space<vmem>>, vector<128x128xbf16>
    %98 = arith.truncf %90 : vector<8x128xf32> to vector<8x128xbf16>
    %cst_53 = arith.constant dense<0.000000e+00> : vector<8x128xf32>
    %99 = tpu.matmul %98, %97, %cst_53 {dimension_numbers = #tpu.dot_dimension_numbers<[1], [0], [0], [1], [0, 0, 1, 1], [], []>} : vector<8x128xbf16>, vector<128x128xbf16>, vector<8x128xf32> -> vector<8x128xf32>
    %c0_54 = arith.constant 0 : index
    %c0_55 = arith.constant 0 : index
    %100 = vector.load %arg7[%c0_54, %c0_55] : memref<1x128xf32, #tpu.memory_space<vmem>>, vector<1x128xf32>
    %101 = vector.broadcast %100 : vector<1x128xf32> to vector<8x128xf32>
    %102 = arith.addf %99, %101 : vector<8x128xf32>
    %c0_56 = arith.constant 0 : index
    %c0_57 = arith.constant 0 : index
    %103 = vector.load %arg8[%c0_56, %c0_57] : memref<8x128xf32, #tpu.memory_space<vmem>>, vector<8x128xf32>
    tpu.vector_store %arg8[%c0_56, %c0_57], %102 {strides = array<i32>} : memref<8x128xf32, #tpu.memory_space<vmem>>, vector<8x128xf32>,
    return
  }
}

</mosaic_0001>

<llo_original>
// kernel: rnn_decoder_forward.1
$region0: #{rnn_decoder_forward.1}
  #allocation0 [shape = 'u32[]', space=smem, size = 0x4, offset = 0x4, fixed_abs, tag = 'smem constant byte address 0x4 - core index']
  #allocation1 [shape = 'u32[144,128]{1,0:T(1,128)}', space=vmem, size = 0x12000, scoped, tag = 'internal scratch']
  %s0 = inlined_call_operand.vmem [shape: f32[8,128], index: 0, kind: input, shape index: {}]
  %s1 = inlined_call_operand.vmem [shape: f32[2,8,128], index: 1, kind: input, shape index: {}, may-alias: {1,9}]
  %s2 = inlined_call_operand.vmem [shape: f32[2,8,128], index: 2, kind: input, shape index: {}, may-alias: {2,10}]
  %s3 = inlined_call_operand.hbm [shape: bf16[2,128,512], index: 3, kind: input, shape index: {}]
  %s4 = inlined_call_operand.hbm [shape: bf16[2,128,512], index: 4, kind: input, shape index: {}]
  %s5 = inlined_call_operand.vmem [shape: f32[2,1,512], index: 5, kind: input, shape index: {}]
  %s6 = inlined_call_operand.vmem [shape: bf16[128,128], index: 6, kind: input, shape index: {}]
  %s7 = inlined_call_operand.vmem [shape: f32[1,128], index: 7, kind: input, shape index: {}]
  %s8 = inlined_call_operand.vmem [shape: f32[8,128], index: 8, kind: output, shape index: {0}]
  %s9 = inlined_call_operand.vmem [shape: f32[2,8,128], index: 9, kind: output, shape index: {1}, may-alias: {1,9}]
  %s10 = inlined_call_operand.vmem [shape: f32[2,8,128], index: 10, kind: output, shape index: {2}, may-alias: {2,10}]
  %11 = xla_tuple %s8, %s9, %s10
  %s12 = sld [smem:[#allocation0]]
  $region66: #{rnn_decoder_forward.1} parent=0
    _
  %s14 = ssub.s32 1, %s12
  %s15 = scalar_select 0, %s14, %s12
  $region1: #{rnn_decoder_forward.1} parent=0
    #allocation2 [shape = 'u8[262144]{0}', space=vmem, size = 0x40000, scoped, tag = 'input window, operand 3, single buffered']
    #allocation3 [shape = 's32[1]{0}', space=sflag, size = 0x4, scoped, tag = 'scoped memory for rnn_decoder_forward.1']
    #allocation4 [shape = 'u8[262144]{0}', space=vmem, size = 0x40000, scoped, tag = 'input window, operand 4, single buffered']
    #allocation5 [shape = 's32[1]{0}', space=sflag, size = 0x4, scoped, tag = 'scoped memory for rnn_decoder_forward.1']
    %16 = vsyncpa [#allocation3], 0
    %17 = vsyncpa [#allocation5], 0
    // Predicated region
    $region2: #{rnn_decoder_forward.1} parent=1 // pred_check
      _
    $region3: #{rnn_decoder_forward.1} parent=1 // pred_check_branch
      %19 = sbr.rel (0) target = $region5
    $region4: #{rnn_decoder_forward.1} parent=1 // pred_region
      _
    $region5: #{rnn_decoder_forward.1} parent=1 // pred_fallthru
      _
    // Predicated region
    $region6: #{rnn_decoder_forward.1} parent=1 // pred_check
      _
    $region7: #{rnn_decoder_forward.1} parent=1 // pred_check_branch
      %21 = sbr.rel (0) target = $region9
    $region8: #{rnn_decoder_forward.1} parent=1 // pred_region
      _
    $region9: #{rnn_decoder_forward.1} parent=1 // pred_fallthru
      _
    // Predicated region
    $region10: #{rnn_decoder_forward.1} parent=1 // pred_check
      _
    $region11: #{rnn_decoder_forward.1} parent=1 // pred_check_branch
      %23 = sbr.rel (0) target = $region13
    $region12: #{rnn_decoder_forward.1} parent=1 // pred_region
      _
    $region13: #{rnn_decoder_forward.1} parent=1 // pred_fallthru
      _
    // Predicated region
    $region14: #{rnn_decoder_forward.1} parent=1 // pred_check
      _
    $region15: #{rnn_decoder_forward.1} parent=1 // pred_check_branch
      %25 = sbr.rel (0) target = $region17
    $region16: #{rnn_decoder_forward.1} parent=1 // pred_region
      %s27 = ssub.s32 8192, 8192
      %28 = vsyncadd [#allocation3], %s27
      %s29 = sshll.u32 [#allocation2], 4
      %s30 = int_to_ptr.vmem [resolvable:$true] %s29
      %35 = dma.hbm_to_vmem [thread:$0]  %s3, 8192, %s30, [#allocation3], 256, 256, 16
    $region17: #{rnn_decoder_forward.1} parent=1 // pred_fallthru
      _
    // Predicated region
    $region18: #{rnn_decoder_forward.1} parent=1 // pred_check
      _
    $region19: #{rnn_decoder_forward.1} parent=1 // pred_check_branch
      %37 = sbr.rel (0) target = $region21
    $region20: #{rnn_decoder_forward.1} parent=1 // pred_region
      %s39 = ssub.s32 8192, 8192
      %40 = vsyncadd [#allocation5], %s39
      %s41 = sshll.u32 [#allocation4], 4
      %s42 = int_to_ptr.vmem [resolvable:$true] %s41
      %47 = dma.hbm_to_vmem [thread:$0]  %s4, 8192, %s42, [#allocation5], 256, 256, 16
    $region21: #{rnn_decoder_forward.1} parent=1 // pred_fallthru
      _
    // Predicated region
    $region22: #{rnn_decoder_forward.1} parent=1 // pred_check
      _
    $region23: #{rnn_decoder_forward.1} parent=1 // pred_check_branch
      %49 = sbr.rel (0) target = $region25
    $region24: #{rnn_decoder_forward.1} parent=1 // pred_region
      _
    $region25: #{rnn_decoder_forward.1} parent=1 // pred_fallthru
      _
    // Predicated region
    $region26: #{rnn_decoder_forward.1} parent=1 // pred_check
      _
    $region27: #{rnn_decoder_forward.1} parent=1 // pred_check_branch
      %51 = sbr.rel (0) target = $region29
    $region28: #{rnn_decoder_forward.1} parent=1 // pred_region
      _
    $region29: #{rnn_decoder_forward.1} parent=1 // pred_fallthru
      _
    // Predicated region
    $region30: #{rnn_decoder_forward.1} parent=1 // pred_check
      _
    $region31: #{rnn_decoder_forward.1} parent=1 // pred_check_branch
      %53 = sbr.rel (0) target = $region33
    $region32: #{rnn_decoder_forward.1} parent=1 // pred_region
      _
    $region33: #{rnn_decoder_forward.1} parent=1 // pred_fallthru
      _
    // Predicated region
    $region34: #{rnn_decoder_forward.1} parent=1 // pred_check
      _
    $region35: #{rnn_decoder_forward.1} parent=1 // pred_check_branch
      %55 = sbr.rel (0) target = $region37
    $region36: #{rnn_decoder_forward.1} parent=1 // pred_region
      %56 = dma.done [#allocation3], 8192
    $region37: #{rnn_decoder_forward.1} parent=1 // pred_fallthru
      _
    // Predicated region
    $region38: #{rnn_decoder_forward.1} parent=1 // pred_check
      _
    $region39: #{rnn_decoder_forward.1} parent=1 // pred_check_branch
      %58 = sbr.rel (0) target = $region41
    $region40: #{rnn_decoder_forward.1} parent=1 // pred_region
      %59 = dma.done [#allocation5], 8192
    $region41: #{rnn_decoder_forward.1} parent=1 // pred_fallthru
      _
    %v61 = vld [vmem:[%s0] sm:$0xff]
    %v62 = vld [vmem:[%s1] sm:$0xff]
    %v63 = vld [vmem:[%s2] sm:$0xff]
    %v64 = vld [vmem:[#allocation2] sm:$0xff]
    %v65 = vld [vmem:[#allocation2 + $0x8] sm:$0xff]
    %v66 = vld [vmem:[#allocation2 + $0x10] sm:$0xff]
    %v67 = vld [vmem:[#allocation2 + $0x18] sm:$0xff]
    %v68 = vld [vmem:[#allocation2 + $0x20] sm:$0xff]
    %v69 = vld [vmem:[#allocation2 + $0x28] sm:$0xff]
    %v70 = vld [vmem:[#allocation2 + $0x30] sm:$0xff]
    %v71 = vld [vmem:[#allocation2 + $0x38] sm:$0xff]
    %v72 = vld [vmem:[#allocation2 + $0x40] sm:$0xff]
    %v73 = vld [vmem:[#allocation2 + $0x48] sm:$0xff]
    %v74 = vld [vmem:[#allocation2 + $0x50] sm:$0xff]
    %v75 = vld [vmem:[#allocation2 + $0x58] sm:$0xff]
    %v76 = vld [vmem:[#allocation2 + $0x60] sm:$0xff]
    %v77 = vld [vmem:[#allocation2 + $0x68] sm:$0xff]
    %v78 = vld [vmem:[#allocation2 + $0x70] sm:$0xff]
    %v79 = vld [vmem:[#allocation2 + $0x78] sm:$0xff]
    %v80 = vld [vmem:[#allocation2 + $0x80] sm:$0xff]
    %v81 = vld [vmem:[#allocation2 + $0x88] sm:$0xff]
    %v82 = vld [vmem:[#allocation2 + $0x90] sm:$0xff]
    %v83 = vld [vmem:[#allocation2 + $0x98] sm:$0xff]
    %v84 = vld [vmem:[#allocation2 + $0xa0] sm:$0xff]
    %v85 = vld [vmem:[#allocation2 + $0xa8] sm:$0xff]
    %v86 = vld [vmem:[#allocation2 + $0xb0] sm:$0xff]
    %v87 = vld [vmem:[#allocation2 + $0xb8] sm:$0xff]
    %v88 = vld [vmem:[#allocation2 + $0xc0] sm:$0xff]
    %v89 = vld [vmem:[#allocation2 + $0xc8] sm:$0xff]
    %v90 = vld [vmem:[#allocation2 + $0xd0] sm:$0xff]
    %v91 = vld [vmem:[#allocation2 + $0xd8] sm:$0xff]
    %v92 = vld [vmem:[#allocation2 + $0xe0] sm:$0xff]
    %v93 = vld [vmem:[#allocation2 + $0xe8] sm:$0xff]
    %v94 = vld [vmem:[#allocation2 + $0xf0] sm:$0xff]
    %v95 = vld [vmem:[#allocation2 + $0xf8] sm:$0xff]
    %v96 = vld [vmem:[#allocation4] sm:$0xff]
    %v97 = vld [vmem:[#allocation4 + $0x8] sm:$0xff]
    %v98 = vld [vmem:[#allocation4 + $0x10] sm:$0xff]
    %v99 = vld [vmem:[#allocation4 + $0x18] sm:$0xff]
    %v100 = vld [vmem:[#allocation4 + $0x20] sm:$0xff]
    %v101 = vld [vmem:[#allocation4 + $0x28] sm:$0xff]
    %v102 = vld [vmem:[#allocation4 + $0x30] sm:$0xff]
    %v103 = vld [vmem:[#allocation4 + $0x38] sm:$0xff]
    %v104 = vld [vmem:[#allocation4 + $0x40] sm:$0xff]
    %v105 = vld [vmem:[#allocation4 + $0x48] sm:$0xff]
    %v106 = vld [vmem:[#allocation4 + $0x50] sm:$0xff]
    %v107 = vld [vmem:[#allocation4 + $0x58] sm:$0xff]
    %v108 = vld [vmem:[#allocation4 + $0x60] sm:$0xff]
    %v109 = vld [vmem:[#allocation4 + $0x68] sm:$0xff]
    %v110 = vld [vmem:[#allocation4 + $0x70] sm:$0xff]
    %v111 = vld [vmem:[#allocation4 + $0x78] sm:$0xff]
    %v112 = vld [vmem:[#allocation4 + $0x80] sm:$0xff]
    %v113 = vld [vmem:[#allocation4 + $0x88] sm:$0xff]
    %v114 = vld [vmem:[#allocation4 + $0x90] sm:$0xff]
    %v115 = vld [vmem:[#allocation4 + $0x98] sm:$0xff]
    %v116 = vld [vmem:[#allocation4 + $0xa0] sm:$0xff]
    %v117 = vld [vmem:[#allocation4 + $0xa8] sm:$0xff]
    %v118 = vld [vmem:[#allocation4 + $0xb0] sm:$0xff]
    %v119 = vld [vmem:[#allocation4 + $0xb8] sm:$0xff]
    %v120 = vld [vmem:[#allocation4 + $0xc0] sm:$0xff]
    %v121 = vld [vmem:[#allocation4 + $0xc8] sm:$0xff]
    %v122 = vld [vmem:[#allocation4 + $0xd0] sm:$0xff]
    %v123 = vld [vmem:[#allocation4 + $0xd8] sm:$0xff]
    %v124 = vld [vmem:[#allocation4 + $0xe0] sm:$0xff]
    %v125 = vld [vmem:[#allocation4 + $0xe8] sm:$0xff]
    %v126 = vld [vmem:[#allocation4 + $0xf0] sm:$0xff]
    %v127 = vld [vmem:[#allocation4 + $0xf8] sm:$0xff]
    %v128 = vpack.c.bf16 %v61, %v61
    %v129 = vpack.c.bf16 %v62, %v62
    %v162 = vunpack.c.l.b16 %v96
    %v163 = vunpack.c.h.b16 %v96
    %v164 = vunpack.c.l.b16 %v97
    %v165 = vunpack.c.h.b16 %v97
    %v166 = vunpack.c.l.b16 %v98
    %v167 = vunpack.c.h.b16 %v98
    %v168 = vunpack.c.l.b16 %v99
    %v169 = vunpack.c.h.b16 %v99
    %v170 = vunpack.c.l.b16 %v100
    %v171 = vunpack.c.h.b16 %v100
    %v172 = vunpack.c.l.b16 %v101
    %v173 = vunpack.c.h.b16 %v101
    %v174 = vunpack.c.l.b16 %v102
    %v175 = vunpack.c.h.b16 %v102
    %v176 = vunpack.c.l.b16 %v103
    %v177 = vunpack.c.h.b16 %v103
    %v178 = vunpack.c.l.b16 %v104
    %v179 = vunpack.c.h.b16 %v104
    %v180 = vunpack.c.l.b16 %v105
    %v181 = vunpack.c.h.b16 %v105
    %v182 = vunpack.c.l.b16 %v106
    %v183 = vunpack.c.h.b16 %v106
    %v184 = vunpack.c.l.b16 %v107
    %v185 = vunpack.c.h.b16 %v107
    %v186 = vunpack.c.l.b16 %v108
    %v187 = vunpack.c.h.b16 %v108
    %v188 = vunpack.c.l.b16 %v109
    %v189 = vunpack.c.h.b16 %v109
    %v190 = vunpack.c.l.b16 %v110
    %v191 = vunpack.c.h.b16 %v110
    %v192 = vunpack.c.l.b16 %v111
    %v193 = vunpack.c.h.b16 %v111
    %v194 = vunpack.c.l.b16 %v112
    %v195 = vunpack.c.h.b16 %v112
    %v196 = vunpack.c.l.b16 %v113
    %v197 = vunpack.c.h.b16 %v113
    %v198 = vunpack.c.l.b16 %v114
    %v199 = vunpack.c.h.b16 %v114
    %v200 = vunpack.c.l.b16 %v115
    %v201 = vunpack.c.h.b16 %v115
    %v202 = vunpack.c.l.b16 %v116
    %v203 = vunpack.c.h.b16 %v116
    %v204 = vunpack.c.l.b16 %v117
    %v205 = vunpack.c.h.b16 %v117
    %v206 = vunpack.c.l.b16 %v118
    %v207 = vunpack.c.h.b16 %v118
    %v208 = vunpack.c.l.b16 %v119
    %v209 = vunpack.c.h.b16 %v119
    %v210 = vunpack.c.l.b16 %v120
    %v211 = vunpack.c.h.b16 %v120
    %v212 = vunpack.c.l.b16 %v121
    %v213 = vunpack.c.h.b16 %v121
    %v214 = vunpack.c.l.b16 %v122
    %v215 = vunpack.c.h.b16 %v122
    %v216 = vunpack.c.l.b16 %v123
    %v217 = vunpack.c.h.b16 %v123
    %v218 = vunpack.c.l.b16 %v124
    %v219 = vunpack.c.h.b16 %v124
    %v220 = vunpack.c.l.b16 %v125
    %v221 = vunpack.c.h.b16 %v125
    %v222 = vunpack.c.l.b16 %v126
    %v223 = vunpack.c.h.b16 %v126
    %v224 = vunpack.c.l.b16 %v127
    %v225 = vunpack.c.h.b16 %v127
    %v226 = vpack.c.b16 %v166, %v162
    %v227 = vpack.c.b16 %v167, %v163
    %v228 = vpack.c.b16 %v168, %v164
    %v229 = vpack.c.b16 %v169, %v165
    %v230 = vpack.c.b16 %v174, %v170
    %v231 = vpack.c.b16 %v175, %v171
    %v232 = vpack.c.b16 %v176, %v172
    %v233 = vpack.c.b16 %v177, %v173
    %v234 = vpack.c.b16 %v182, %v178
    %v235 = vpack.c.b16 %v183, %v179
    %v236 = vpack.c.b16 %v184, %v180
    %v237 = vpack.c.b16 %v185, %v181
    %v238 = vpack.c.b16 %v190, %v186
    %v239 = vpack.c.b16 %v191, %v187
    %v240 = vpack.c.b16 %v192, %v188
    %v241 = vpack.c.b16 %v193, %v189
    %v242 = vpack.c.b16 %v198, %v194
    %v243 = vpack.c.b16 %v199, %v195
    %v244 = vpack.c.b16 %v200, %v196
    %v245 = vpack.c.b16 %v201, %v197
    %v246 = vpack.c.b16 %v206, %v202
    %v247 = vpack.c.b16 %v207, %v203
    %v248 = vpack.c.b16 %v208, %v204
    %v249 = vpack.c.b16 %v209, %v205
    %v250 = vpack.c.b16 %v214, %v210
    %v251 = vpack.c.b16 %v215, %v211
    %v252 = vpack.c.b16 %v216, %v212
    %v253 = vpack.c.b16 %v217, %v213
    %v254 = vpack.c.b16 %v222, %v218
    %v255 = vpack.c.b16 %v223, %v219
    %v256 = vpack.c.b16 %v224, %v220
    %v257 = vpack.c.b16 %v225, %v221
    %290 = vmatprep.subr.bf16.mxu0 %v255
    %291 = vmatpush1.bf16.msra.mxu0 %v254
    %292 = vmatprep.subr.bf16.mxu0 %v251
    %293 = vmatpush1.bf16.msra.mxu0 %v250
    %294 = vmatprep.subr.bf16.mxu0 %v247
    %295 = vmatpush1.bf16.msra.mxu0 %v246
    %296 = vmatprep.subr.bf16.mxu0 %v243
    %297 = vmatpush1.bf16.msra.mxu0 %v242
    %298 = vmatprep.subr.bf16.mxu0 %v239
    %299 = vmatpush1.bf16.msra.mxu0 %v238
    %300 = vmatprep.subr.bf16.mxu0 %v235
    %301 = vmatpush1.bf16.msra.mxu0 %v234
    %302 = vmatprep.subr.bf16.mxu0 %v231
    %303 = vmatpush1.bf16.msra.mxu0 %v230
    %304 = vmatprep.subr.bf16.mxu0 %v227
    %305 = vmatpush1.bf16.msra.mxu0 %v226
    %306 = vmatprep.subr.bf16.mxu0 0
    %307 = vmatpush2.bf16.msra.mxu0 0
    %308 = vmatprep.subr.bf16.mxu0 0
    %309 = vmatpush2.bf16.msra.mxu0 0
    %310 = vmatprep.subr.bf16.mxu0 0
    %311 = vmatpush2.bf16.msra.mxu0 0
    %312 = vmatprep.subr.bf16.mxu0 0
    %313 = vmatpush2.bf16.msra.mxu0 0
    %314 = vmatprep.subr.bf16.mxu0 0
    %315 = vmatpush2.bf16.msra.mxu0 0
    %316 = vmatprep.subr.bf16.mxu0 0
    %317 = vmatpush2.bf16.msra.mxu0 0
    %318 = vmatprep.subr.bf16.mxu0 0
    %319 = vmatpush2.bf16.msra.mxu0 0
    %320 = vmatprep.subr.bf16.mxu0 0
    %321 = vmatpush2.bf16.msra.mxu0 0
    %322 = vmatprep.mubr.bf16.mxu0 0
    %323 = vmatmul.mubr.bf16.gmra.mxu0 %v129
    %v324 = vpop.f32.mrf.mxu0
    %v325 = vadd.f32 0.0, %v324
    %v326 = vpop.f32.mrf.mxu0
    %v327 = vadd.f32 0.0, %v326
    %v328 = vpop.f32.mrf.mxu0
    %v329 = vpop.f32.mrf.mxu0
    %330 = vdwg.mxu0
    %331 = vmatprep.subr.bf16.mxu0 %v257
    %332 = vmatpush1.bf16.msra.mxu0 %v256
    %333 = vmatprep.subr.bf16.mxu0 %v253
    %334 = vmatpush1.bf16.msra.mxu0 %v252
    %335 = vmatprep.subr.bf16.mxu0 %v249
    %336 = vmatpush1.bf16.msra.mxu0 %v248
    %337 = vmatprep.subr.bf16.mxu0 %v245
    %338 = vmatpush1.bf16.msra.mxu0 %v244
    %339 = vmatprep.subr.bf16.mxu0 %v241
    %340 = vmatpush1.bf16.msra.mxu0 %v240
    %341 = vmatprep.subr.bf16.mxu0 %v237
    %342 = vmatpush1.bf16.msra.mxu0 %v236
    %343 = vmatprep.subr.bf16.mxu0 %v233
    %344 = vmatpush1.bf16.msra.mxu0 %v232
    %345 = vmatprep.subr.bf16.mxu0 %v229
    %346 = vmatpush1.bf16.msra.mxu0 %v228
    %347 = vmatprep.subr.bf16.mxu0 0
    %348 = vmatpush2.bf16.msra.mxu0 0
    %349 = vmatprep.subr.bf16.mxu0 0
    %350 = vmatpush2.bf16.msra.mxu0 0
    %351 = vmatprep.subr.bf16.mxu0 0
    %352 = vmatpush2.bf16.msra.mxu0 0
    %353 = vmatprep.subr.bf16.mxu0 0
    %354 = vmatpush2.bf16.msra.mxu0 0
    %355 = vmatprep.subr.bf16.mxu0 0
    %356 = vmatpush2.bf16.msra.mxu0 0
    %357 = vmatprep.subr.bf16.mxu0 0
    %358 = vmatpush2.bf16.msra.mxu0 0
    %359 = vmatprep.subr.bf16.mxu0 0
    %360 = vmatpush2.bf16.msra.mxu0 0
    %361 = vmatprep.subr.bf16.mxu0 0
    %362 = vmatpush2.bf16.msra.mxu0 0
    %363 = vmatprep.mubr.bf16.mxu0 0
    %364 = vmatmul.mubr.bf16.gmra.mxu0 %v129
    %v365 = vpop.f32.mrf.mxu0
    %v366 = vadd.f32 0.0, %v365
    %v367 = vpop.f32.mrf.mxu0
    %v368 = vadd.f32 0.0, %v367
    %v369 = vpop.f32.mrf.mxu0
    %v370 = vpop.f32.mrf.mxu0
    %371 = vdwg.mxu0
    %v404 = vunpack.c.l.b16 %v64
    %v405 = vunpack.c.h.b16 %v64
    %v406 = vunpack.c.l.b16 %v65
    %v407 = vunpack.c.h.b16 %v65
    %v408 = vunpack.c.l.b16 %v66
    %v409 = vunpack.c.h.b16 %v66
    %v410 = vunpack.c.l.b16 %v67
    %v411 = vunpack.c.h.b16 %v67
    %v412 = vunpack.c.l.b16 %v68
    %v413 = vunpack.c.h.b16 %v68
    %v414 = vunpack.c.l.b16 %v69
    %v415 = vunpack.c.h.b16 %v69
    %v416 = vunpack.c.l.b16 %v70
    %v417 = vunpack.c.h.b16 %v70
    %v418 = vunpack.c.l.b16 %v71
    %v419 = vunpack.c.h.b16 %v71
    %v420 = vunpack.c.l.b16 %v72
    %v421 = vunpack.c.h.b16 %v72
    %v422 = vunpack.c.l.b16 %v73
    %v423 = vunpack.c.h.b16 %v73
    %v424 = vunpack.c.l.b16 %v74
    %v425 = vunpack.c.h.b16 %v74
    %v426 = vunpack.c.l.b16 %v75
    %v427 = vunpack.c.h.b16 %v75
    %v428 = vunpack.c.l.b16 %v76
    %v429 = vunpack.c.h.b16 %v76
    %v430 = vunpack.c.l.b16 %v77
    %v431 = vunpack.c.h.b16 %v77
    %v432 = vunpack.c.l.b16 %v78
    %v433 = vunpack.c.h.b16 %v78
    %v434 = vunpack.c.l.b16 %v79
    %v435 = vunpack.c.h.b16 %v79
    %v436 = vunpack.c.l.b16 %v80
    %v437 = vunpack.c.h.b16 %v80
    %v438 = vunpack.c.l.b16 %v81
    %v439 = vunpack.c.h.b16 %v81
    %v440 = vunpack.c.l.b16 %v82
    %v441 = vunpack.c.h.b16 %v82
    %v442 = vunpack.c.l.b16 %v83
    %v443 = vunpack.c.h.b16 %v83
    %v444 = vunpack.c.l.b16 %v84
    %v445 = vunpack.c.h.b16 %v84
    %v446 = vunpack.c.l.b16 %v85
    %v447 = vunpack.c.h.b16 %v85
    %v448 = vunpack.c.l.b16 %v86
    %v449 = vunpack.c.h.b16 %v86
    %v450 = vunpack.c.l.b16 %v87
    %v451 = vunpack.c.h.b16 %v87
    %v452 = vunpack.c.l.b16 %v88
    %v453 = vunpack.c.h.b16 %v88
    %v454 = vunpack.c.l.b16 %v89
    %v455 = vunpack.c.h.b16 %v89
    %v456 = vunpack.c.l.b16 %v90
    %v457 = vunpack.c.h.b16 %v90
    %v458 = vunpack.c.l.b16 %v91
    %v459 = vunpack.c.h.b16 %v91
    %v460 = vunpack.c.l.b16 %v92
    %v461 = vunpack.c.h.b16 %v92
    %v462 = vunpack.c.l.b16 %v93
    %v463 = vunpack.c.h.b16 %v93
    %v464 = vunpack.c.l.b16 %v94
    %v465 = vunpack.c.h.b16 %v94
    %v466 = vunpack.c.l.b16 %v95
    %v467 = vunpack.c.h.b16 %v95
    %v468 = vpack.c.b16 %v408, %v404
    %v469 = vpack.c.b16 %v409, %v405
    %v470 = vpack.c.b16 %v410, %v406
    %v471 = vpack.c.b16 %v411, %v407
    %v472 = vpack.c.b16 %v416, %v412
    %v473 = vpack.c.b16 %v417, %v413
    %v474 = vpack.c.b16 %v418, %v414
    %v475 = vpack.c.b16 %v419, %v415
    %v476 = vpack.c.b16 %v424, %v420
    %v477 = vpack.c.b16 %v425, %v421
    %v478 = vpack.c.b16 %v426, %v422
    %v479 = vpack.c.b16 %v427, %v423
    %v480 = vpack.c.b16 %v432, %v428
    %v481 = vpack.c.b16 %v433, %v429
    %v482 = vpack.c.b16 %v434, %v430
    %v483 = vpack.c.b16 %v435, %v431
    %v484 = vpack.c.b16 %v440, %v436
    %v485 = vpack.c.b16 %v441, %v437
    %v486 = vpack.c.b16 %v442, %v438
    %v487 = vpack.c.b16 %v443, %v439
    %v488 = vpack.c.b16 %v448, %v444
    %v489 = vpack.c.b16 %v449, %v445
    %v490 = vpack.c.b16 %v450, %v446
    %v491 = vpack.c.b16 %v451, %v447
    %v492 = vpack.c.b16 %v456, %v452
    %v493 = vpack.c.b16 %v457, %v453
    %v494 = vpack.c.b16 %v458, %v454
    %v495 = vpack.c.b16 %v459, %v455
    %v496 = vpack.c.b16 %v464, %v460
    %v497 = vpack.c.b16 %v465, %v461
    %v498 = vpack.c.b16 %v466, %v462
    %v499 = vpack.c.b16 %v467, %v463
    %532 = vmatprep.subr.bf16.mxu0 %v497
    %533 = vmatpush1.bf16.msra.mxu0 %v496
    %534 = vmatprep.subr.bf16.mxu0 %v493
    %535 = vmatpush1.bf16.msra.mxu0 %v492
    %536 = vmatprep.subr.bf16.mxu0 %v489
    %537 = vmatpush1.bf16.msra.mxu0 %v488
    %538 = vmatprep.subr.bf16.mxu0 %v485
    %539 = vmatpush1.bf16.msra.mxu0 %v484
    %540 = vmatprep.subr.bf16.mxu0 %v481
    %541 = vmatpush1.bf16.msra.mxu0 %v480
    %542 = vmatprep.subr.bf16.mxu0 %v477
    %543 = vmatpush1.bf16.msra.mxu0 %v476
    %544 = vmatprep.subr.bf16.mxu0 %v473
    %545 = vmatpush1.bf16.msra.mxu0 %v472
    %546 = vmatprep.subr.bf16.mxu0 %v469
    %547 = vmatpush1.bf16.msra.mxu0 %v468
    %548 = vmatprep.subr.bf16.mxu0 0
    %549 = vmatpush2.bf16.msra.mxu0 0
    %550 = vmatprep.subr.bf16.mxu0 0
    %551 = vmatpush2.bf16.msra.mxu0 0
    %552 = vmatprep.subr.bf16.mxu0 0
    %553 = vmatpush2.bf16.msra.mxu0 0
    %554 = vmatprep.subr.bf16.mxu0 0
    %555 = vmatpush2.bf16.msra.mxu0 0
    %556 = vmatprep.subr.bf16.mxu0 0
    %557 = vmatpush2.bf16.msra.mxu0 0
    %558 = vmatprep.subr.bf16.mxu0 0
    %559 = vmatpush2.bf16.msra.mxu0 0
    %560 = vmatprep.subr.bf16.mxu0 0
    %561 = vmatpush2.bf16.msra.mxu0 0
    %562 = vmatprep.subr.bf16.mxu0 0
    %563 = vmatpush2.bf16.msra.mxu0 0
    %564 = vmatprep.mubr.bf16.mxu0 0
    %565 = vmatmul.mubr.bf16.gmra.mxu0 %v128
    %v566 = vpop.f32.mrf.mxu0
    %v567 = vadd.f32 %v325, %v566
    %v568 = vpop.f32.mrf.mxu0
    %v569 = vadd.f32 %v327, %v568
    %v570 = vpop.f32.mrf.mxu0
    %v571 = vpop.f32.mrf.mxu0
    %572 = vdwg.mxu0
    %573 = vmatprep.subr.bf16.mxu0 %v499
    %574 = vmatpush1.bf16.msra.mxu0 %v498
    %575 = vmatprep.subr.bf16.mxu0 %v495
    %576 = vmatpush1.bf16.msra.mxu0 %v494
    %577 = vmatprep.subr.bf16.mxu0 %v491
    %578 = vmatpush1.bf16.msra.mxu0 %v490
    %579 = vmatprep.subr.bf16.mxu0 %v487
    %580 = vmatpush1.bf16.msra.mxu0 %v486
    %581 = vmatprep.subr.bf16.mxu0 %v483
    %582 = vmatpush1.bf16.msra.mxu0 %v482
    %583 = vmatprep.subr.bf16.mxu0 %v479
    %584 = vmatpush1.bf16.msra.mxu0 %v478
    %585 = vmatprep.subr.bf16.mxu0 %v475
    %586 = vmatpush1.bf16.msra.mxu0 %v474
    %587 = vmatprep.subr.bf16.mxu0 %v471
    %588 = vmatpush1.bf16.msra.mxu0 %v470
    %589 = vmatprep.subr.bf16.mxu0 0
    %590 = vmatpush2.bf16.msra.mxu0 0
    %591 = vmatprep.subr.bf16.mxu0 0
    %592 = vmatpush2.bf16.msra.mxu0 0
    %593 = vmatprep.subr.bf16.mxu0 0
    %594 = vmatpush2.bf16.msra.mxu0 0
    %595 = vmatprep.subr.bf16.mxu0 0
    %596 = vmatpush2.bf16.msra.mxu0 0
    %597 = vmatprep.subr.bf16.mxu0 0
    %598 = vmatpush2.bf16.msra.mxu0 0
    %599 = vmatprep.subr.bf16.mxu0 0
    %600 = vmatpush2.bf16.msra.mxu0 0
    %601 = vmatprep.subr.bf16.mxu0 0
    %602 = vmatpush2.bf16.msra.mxu0 0
    %603 = vmatprep.subr.bf16.mxu0 0
    %604 = vmatpush2.bf16.msra.mxu0 0
    %605 = vmatprep.mubr.bf16.mxu0 0
    %606 = vmatmul.mubr.bf16.gmra.mxu0 %v128
    %v607 = vpop.f32.mrf.mxu0
    %v608 = vadd.f32 %v366, %v607
    %v609 = vpop.f32.mrf.mxu0
    %v610 = vadd.f32 %v368, %v609
    %v611 = vpop.f32.mrf.mxu0
    %v612 = vpop.f32.mrf.mxu0
    %613 = vdwg.mxu0
    %v614 = vld [vmem:[%s5] sm:$0xf]
    %v616 = vlaneseq
    %v617 = vshrl.u32 %v616, 7
    %v618 = vsub.s32 0, %v617
    %v619 = vrot.slane %v614, %v618
    %v620 = vlaneseq
    %v621 = vshrl.u32 %v620, 7
    %v622 = vsub.s32 1, %v621
    %v623 = vrot.slane %v614, %v622
    %v624 = vlaneseq
    %v625 = vshrl.u32 %v624, 7
    %v626 = vsub.s32 2, %v625
    %v627 = vrot.slane %v614, %v626
    %v628 = vlaneseq
    %v629 = vshrl.u32 %v628, 7
    %v630 = vsub.s32 3, %v629
    %v631 = vrot.slane %v614, %v630
    %v636 = vadd.f32 %v567, %v619
    %v637 = vadd.f32 %v569, %v623
    %v638 = vadd.f32 %v608, %v627
    %v639 = vadd.f32 %v610, %v631
    %v640 = vxor.u32 %v636, 2147483648
    %v641 = vmul.f32 %v640, 1.442695
    %v642 = vpow.pop %v641
    %v643 = vadd.f32 %v642, 1.0
    %v644 = vrcp.pop %v643
    %v645 = vmul.f32 1.0, %v644
    %v646 = vxor.u32 %v637, 2147483648
    %v647 = vmul.f32 %v646, 1.442695
    %v648 = vpow.pop %v647
    %v649 = vadd.f32 %v648, 1.0
    %v650 = vrcp.pop %v649
    %v651 = vmul.f32 1.0, %v650
    %v652 = vtanh.pop %v638
    %v653 = vxor.u32 %v639, 2147483648
    %v654 = vmul.f32 %v653, 1.442695
    %v655 = vpow.pop %v654
    %v656 = vadd.f32 %v655, 1.0
    %v657 = vrcp.pop %v656
    %v658 = vmul.f32 1.0, %v657
    %v659 = vmul.f32 %v651, %v63
    %v660 = vmul.f32 %v645, %v652
    %v661 = vadd.f32 %v659, %v660
    %v662 = vtanh.pop %v661
    %v663 = vmul.f32 %v658, %v662
    %664 = vst [vmem:[%s9] sm:$0xff] %v663
    %665 = vst [vmem:[%s10] sm:$0xff] %v661
    %s666 = scalar_lea.vmem %s1, 8
    %v667 = vld [vmem:[%s666] sm:$0xff]
    %s668 = scalar_lea.vmem %s2, 8
    %v669 = vld [vmem:[%s668] sm:$0xff]
    %s670 = scalar_lea.vmem [#allocation2], 256
    %v671 = vld [vmem:[%s670] sm:$0xff]
    %v672 = vld [vmem:[%s670 + $0x8] sm:$0xff]
    %v673 = vld [vmem:[%s670 + $0x10] sm:$0xff]
    %v674 = vld [vmem:[%s670 + $0x18] sm:$0xff]
    %v675 = vld [vmem:[%s670 + $0x20] sm:$0xff]
    %v676 = vld [vmem:[%s670 + $0x28] sm:$0xff]
    %v677 = vld [vmem:[%s670 + $0x30] sm:$0xff]
    %v678 = vld [vmem:[%s670 + $0x38] sm:$0xff]
    %v679 = vld [vmem:[%s670 + $0x40] sm:$0xff]
    %v680 = vld [vmem:[%s670 + $0x48] sm:$0xff]
    %v681 = vld [vmem:[%s670 + $0x50] sm:$0xff]
    %v682 = vld [vmem:[%s670 + $0x58] sm:$0xff]
    %v683 = vld [vmem:[%s670 + $0x60] sm:$0xff]
    %v684 = vld [vmem:[%s670 + $0x68] sm:$0xff]
    %v685 = vld [vmem:[%s670 + $0x70] sm:$0xff]
    %v686 = vld [vmem:[%s670 + $0x78] sm:$0xff]
    %v687 = vld [vmem:[%s670 + $0x80] sm:$0xff]
    %v688 = vld [vmem:[%s670 + $0x88] sm:$0xff]
    %v689 = vld [vmem:[%s670 + $0x90] sm:$0xff]
    %v690 = vld [vmem:[%s670 + $0x98] sm:$0xff]
    %v691 = vld [vmem:[%s670 + $0xa0] sm:$0xff]
    %v692 = vld [vmem:[%s670 + $0xa8] sm:$0xff]
    %v693 = vld [vmem:[%s670 + $0xb0] sm:$0xff]
    %v694 = vld [vmem:[%s670 + $0xb8] sm:$0xff]
    %v695 = vld [vmem:[%s670 + $0xc0] sm:$0xff]
    %v696 = vld [vmem:[%s670 + $0xc8] sm:$0xff]
    %v697 = vld [vmem:[%s670 + $0xd0] sm:$0xff]
    %v698 = vld [vmem:[%s670 + $0xd8] sm:$0xff]
    %v699 = vld [vmem:[%s670 + $0xe0] sm:$0xff]
    %v700 = vld [vmem:[%s670 + $0xe8] sm:$0xff]
    %v701 = vld [vmem:[%s670 + $0xf0] sm:$0xff]
    %v702 = vld [vmem:[%s670 + $0xf8] sm:$0xff]
    %s703 = scalar_lea.vmem [#allocation4], 256
    %v704 = vld [vmem:[%s703] sm:$0xff]
    %v705 = vld [vmem:[%s703 + $0x8] sm:$0xff]
    %v706 = vld [vmem:[%s703 + $0x10] sm:$0xff]
    %v707 = vld [vmem:[%s703 + $0x18] sm:$0xff]
    %v708 = vld [vmem:[%s703 + $0x20] sm:$0xff]
    %v709 = vld [vmem:[%s703 + $0x28] sm:$0xff]
    %v710 = vld [vmem:[%s703 + $0x30] sm:$0xff]
    %v711 = vld [vmem:[%s703 + $0x38] sm:$0xff]
    %v712 = vld [vmem:[%s703 + $0x40] sm:$0xff]
    %v713 = vld [vmem:[%s703 + $0x48] sm:$0xff]
    %v714 = vld [vmem:[%s703 + $0x50] sm:$0xff]
    %v715 = vld [vmem:[%s703 + $0x58] sm:$0xff]
    %v716 = vld [vmem:[%s703 + $0x60] sm:$0xff]
    %v717 = vld [vmem:[%s703 + $0x68] sm:$0xff]
    %v718 = vld [vmem:[%s703 + $0x70] sm:$0xff]
    %v719 = vld [vmem:[%s703 + $0x78] sm:$0xff]
    %v720 = vld [vmem:[%s703 + $0x80] sm:$0xff]
    %v721 = vld [vmem:[%s703 + $0x88] sm:$0xff]
    %v722 = vld [vmem:[%s703 + $0x90] sm:$0xff]
    %v723 = vld [vmem:[%s703 + $0x98] sm:$0xff]
    %v724 = vld [vmem:[%s703 + $0xa0] sm:$0xff]
    %v725 = vld [vmem:[%s703 + $0xa8] sm:$0xff]
    %v726 = vld [vmem:[%s703 + $0xb0] sm:$0xff]
    %v727 = vld [vmem:[%s703 + $0xb8] sm:$0xff]
    %v728 = vld [vmem:[%s703 + $0xc0] sm:$0xff]
    %v729 = vld [vmem:[%s703 + $0xc8] sm:$0xff]
    %v730 = vld [vmem:[%s703 + $0xd0] sm:$0xff]
    %v731 = vld [vmem:[%s703 + $0xd8] sm:$0xff]
    %v732 = vld [vmem:[%s703 + $0xe0] sm:$0xff]
    %v733 = vld [vmem:[%s703 + $0xe8] sm:$0xff]
    %v734 = vld [vmem:[%s703 + $0xf0] sm:$0xff]
    %v735 = vld [vmem:[%s703 + $0xf8] sm:$0xff]
    %v736 = vpack.c.bf16 %v663, %v663
    %v737 = vpack.c.bf16 %v667, %v667
    %v770 = vunpack.c.l.b16 %v704
    %v771 = vunpack.c.h.b16 %v704
    %v772 = vunpack.c.l.b16 %v705
    %v773 = vunpack.c.h.b16 %v705
    %v774 = vunpack.c.l.b16 %v706
    %v775 = vunpack.c.h.b16 %v706
    %v776 = vunpack.c.l.b16 %v707
    %v777 = vunpack.c.h.b16 %v707
    %v778 = vunpack.c.l.b16 %v708
    %v779 = vunpack.c.h.b16 %v708
    %v780 = vunpack.c.l.b16 %v709
    %v781 = vunpack.c.h.b16 %v709
    %v782 = vunpack.c.l.b16 %v710
    %v783 = vunpack.c.h.b16 %v710
    %v784 = vunpack.c.l.b16 %v711
    %v785 = vunpack.c.h.b16 %v711
    %v786 = vunpack.c.l.b16 %v712
    %v787 = vunpack.c.h.b16 %v712
    %v788 = vunpack.c.l.b16 %v713
    %v789 = vunpack.c.h.b16 %v713
    %v790 = vunpack.c.l.b16 %v714
    %v791 = vunpack.c.h.b16 %v714
    %v792 = vunpack.c.l.b16 %v715
    %v793 = vunpack.c.h.b16 %v715
    %v794 = vunpack.c.l.b16 %v716
    %v795 = vunpack.c.h.b16 %v716
    %v796 = vunpack.c.l.b16 %v717
    %v797 = vunpack.c.h.b16 %v717
    %v798 = vunpack.c.l.b16 %v718
    %v799 = vunpack.c.h.b16 %v718
    %v800 = vunpack.c.l.b16 %v719
    %v801 = vunpack.c.h.b16 %v719
    %v802 = vunpack.c.l.b16 %v720
    %v803 = vunpack.c.h.b16 %v720
    %v804 = vunpack.c.l.b16 %v721
    %v805 = vunpack.c.h.b16 %v721
    %v806 = vunpack.c.l.b16 %v722
    %v807 = vunpack.c.h.b16 %v722
    %v808 = vunpack.c.l.b16 %v723
    %v809 = vunpack.c.h.b16 %v723
    %v810 = vunpack.c.l.b16 %v724
    %v811 = vunpack.c.h.b16 %v724
    %v812 = vunpack.c.l.b16 %v725
    %v813 = vunpack.c.h.b16 %v725
    %v814 = vunpack.c.l.b16 %v726
    %v815 = vunpack.c.h.b16 %v726
    %v816 = vunpack.c.l.b16 %v727
    %v817 = vunpack.c.h.b16 %v727
    %v818 = vunpack.c.l.b16 %v728
    %v819 = vunpack.c.h.b16 %v728
    %v820 = vunpack.c.l.b16 %v729
    %v821 = vunpack.c.h.b16 %v729
    %v822 = vunpack.c.l.b16 %v730
    %v823 = vunpack.c.h.b16 %v730
    %v824 = vunpack.c.l.b16 %v731
    %v825 = vunpack.c.h.b16 %v731
    %v826 = vunpack.c.l.b16 %v732
    %v827 = vunpack.c.h.b16 %v732
    %v828 = vunpack.c.l.b16 %v733
    %v829 = vunpack.c.h.b16 %v733
    %v830 = vunpack.c.l.b16 %v734
    %v831 = vunpack.c.h.b16 %v734
    %v832 = vunpack.c.l.b16 %v735
    %v833 = vunpack.c.h.b16 %v735
    %v834 = vpack.c.b16 %v774, %v770
    %v835 = vpack.c.b16 %v775, %v771
    %v836 = vpack.c.b16 %v776, %v772
    %v837 = vpack.c.b16 %v777, %v773
    %v838 = vpack.c.b16 %v782, %v778
    %v839 = vpack.c.b16 %v783, %v779
    %v840 = vpack.c.b16 %v784, %v780
    %v841 = vpack.c.b16 %v785, %v781
    %v842 = vpack.c.b16 %v790, %v786
    %v843 = vpack.c.b16 %v791, %v787
    %v844 = vpack.c.b16 %v792, %v788
    %v845 = vpack.c.b16 %v793, %v789
    %v846 = vpack.c.b16 %v798, %v794
    %v847 = vpack.c.b16 %v799, %v795
    %v848 = vpack.c.b16 %v800, %v796
    %v849 = vpack.c.b16 %v801, %v797
    %v850 = vpack.c.b16 %v806, %v802
    %v851 = vpack.c.b16 %v807, %v803
    %v852 = vpack.c.b16 %v808, %v804
    %v853 = vpack.c.b16 %v809, %v805
    %v854 = vpack.c.b16 %v814, %v810
    %v855 = vpack.c.b16 %v815, %v811
    %v856 = vpack.c.b16 %v816, %v812
    %v857 = vpack.c.b16 %v817, %v813
    %v858 = vpack.c.b16 %v822, %v818
    %v859 = vpack.c.b16 %v823, %v819
    %v860 = vpack.c.b16 %v824, %v820
    %v861 = vpack.c.b16 %v825, %v821
    %v862 = vpack.c.b16 %v830, %v826
    %v863 = vpack.c.b16 %v831, %v827
    %v864 = vpack.c.b16 %v832, %v828
    %v865 = vpack.c.b16 %v833, %v829
    %898 = vmatprep.subr.bf16.mxu0 %v863
    %899 = vmatpush1.bf16.msra.mxu0 %v862
    %900 = vmatprep.subr.bf16.mxu0 %v859
    %901 = vmatpush1.bf16.msra.mxu0 %v858
    %902 = vmatprep.subr.bf16.mxu0 %v855
    %903 = vmatpush1.bf16.msra.mxu0 %v854
    %904 = vmatprep.subr.bf16.mxu0 %v851
    %905 = vmatpush1.bf16.msra.mxu0 %v850
    %906 = vmatprep.subr.bf16.mxu0 %v847
    %907 = vmatpush1.bf16.msra.mxu0 %v846
    %908 = vmatprep.subr.bf16.mxu0 %v843
    %909 = vmatpush1.bf16.msra.mxu0 %v842
    %910 = vmatprep.subr.bf16.mxu0 %v839
    %911 = vmatpush1.bf16.msra.mxu0 %v838
    %912 = vmatprep.subr.bf16.mxu0 %v835
    %913 = vmatpush1.bf16.msra.mxu0 %v834
    %914 = vmatprep.subr.bf16.mxu0 0
    %915 = vmatpush2.bf16.msra.mxu0 0
    %916 = vmatprep.subr.bf16.mxu0 0
    %917 = vmatpush2.bf16.msra.mxu0 0
    %918 = vmatprep.subr.bf16.mxu0 0
    %919 = vmatpush2.bf16.msra.mxu0 0
    %920 = vmatprep.subr.bf16.mxu0 0
    %921 = vmatpush2.bf16.msra.mxu0 0
    %922 = vmatprep.subr.bf16.mxu0 0
    %923 = vmatpush2.bf16.msra.mxu0 0
    %924 = vmatprep.subr.bf16.mxu0 0
    %925 = vmatpush2.bf16.msra.mxu0 0
    %926 = vmatprep.subr.bf16.mxu0 0
    %927 = vmatpush2.bf16.msra.mxu0 0
    %928 = vmatprep.subr.bf16.mxu0 0
    %929 = vmatpush2.bf16.msra.mxu0 0
    %930 = vmatprep.mubr.bf16.mxu0 0
    %931 = vmatmul.mubr.bf16.gmra.mxu0 %v737
    %v932 = vpop.f32.mrf.mxu0
    %v933 = vadd.f32 0.0, %v932
    %v934 = vpop.f32.mrf.mxu0
    %v935 = vadd.f32 0.0, %v934
    %v936 = vpop.f32.mrf.mxu0
    %v937 = vpop.f32.mrf.mxu0
    %938 = vdwg.mxu0
    %939 = vmatprep.subr.bf16.mxu0 %v865
    %940 = vmatpush1.bf16.msra.mxu0 %v864
    %941 = vmatprep.subr.bf16.mxu0 %v861
    %942 = vmatpush1.bf16.msra.mxu0 %v860
    %943 = vmatprep.subr.bf16.mxu0 %v857
    %944 = vmatpush1.bf16.msra.mxu0 %v856
    %945 = vmatprep.subr.bf16.mxu0 %v853
    %946 = vmatpush1.bf16.msra.mxu0 %v852
    %947 = vmatprep.subr.bf16.mxu0 %v849
    %948 = vmatpush1.bf16.msra.mxu0 %v848
    %949 = vmatprep.subr.bf16.mxu0 %v845
    %950 = vmatpush1.bf16.msra.mxu0 %v844
    %951 = vmatprep.subr.bf16.mxu0 %v841
    %952 = vmatpush1.bf16.msra.mxu0 %v840
    %953 = vmatprep.subr.bf16.mxu0 %v837
    %954 = vmatpush1.bf16.msra.mxu0 %v836
    %955 = vmatprep.subr.bf16.mxu0 0
    %956 = vmatpush2.bf16.msra.mxu0 0
    %957 = vmatprep.subr.bf16.mxu0 0
    %958 = vmatpush2.bf16.msra.mxu0 0
    %959 = vmatprep.subr.bf16.mxu0 0
    %960 = vmatpush2.bf16.msra.mxu0 0
    %961 = vmatprep.subr.bf16.mxu0 0
    %962 = vmatpush2.bf16.msra.mxu0 0
    %963 = vmatprep.subr.bf16.mxu0 0
    %964 = vmatpush2.bf16.msra.mxu0 0
    %965 = vmatprep.subr.bf16.mxu0 0
    %966 = vmatpush2.bf16.msra.mxu0 0
    %967 = vmatprep.subr.bf16.mxu0 0
    %968 = vmatpush2.bf16.msra.mxu0 0
    %969 = vmatprep.subr.bf16.mxu0 0
    %970 = vmatpush2.bf16.msra.mxu0 0
    %971 = vmatprep.mubr.bf16.mxu0 0
    %972 = vmatmul.mubr.bf16.gmra.mxu0 %v737
    %v973 = vpop.f32.mrf.mxu0
    %v974 = vadd.f32 0.0, %v973
    %v975 = vpop.f32.mrf.mxu0
    %v976 = vadd.f32 0.0, %v975
    %v977 = vpop.f32.mrf.mxu0
    %v978 = vpop.f32.mrf.mxu0
    %979 = vdwg.mxu0
    %v1012 = vunpack.c.l.b16 %v671
    %v1013 = vunpack.c.h.b16 %v671
    %v1014 = vunpack.c.l.b16 %v672
    %v1015 = vunpack.c.h.b16 %v672
    %v1016 = vunpack.c.l.b16 %v673
    %v1017 = vunpack.c.h.b16 %v673
    %v1018 = vunpack.c.l.b16 %v674
    %v1019 = vunpack.c.h.b16 %v674
    %v1020 = vunpack.c.l.b16 %v675
    %v1021 = vunpack.c.h.b16 %v675
    %v1022 = vunpack.c.l.b16 %v676
    %v1023 = vunpack.c.h.b16 %v676
    %v1024 = vunpack.c.l.b16 %v677
    %v1025 = vunpack.c.h.b16 %v677
    %v1026 = vunpack.c.l.b16 %v678
    %v1027 = vunpack.c.h.b16 %v678
    %v1028 = vunpack.c.l.b16 %v679
    %v1029 = vunpack.c.h.b16 %v679
    %v1030 = vunpack.c.l.b16 %v680
    %v1031 = vunpack.c.h.b16 %v680
    %v1032 = vunpack.c.l.b16 %v681
    %v1033 = vunpack.c.h.b16 %v681
    %v1034 = vunpack.c.l.b16 %v682
    %v1035 = vunpack.c.h.b16 %v682
    %v1036 = vunpack.c.l.b16 %v683
    %v1037 = vunpack.c.h.b16 %v683
    %v1038 = vunpack.c.l.b16 %v684
    %v1039 = vunpack.c.h.b16 %v684
    %v1040 = vunpack.c.l.b16 %v685
    %v1041 = vunpack.c.h.b16 %v685
    %v1042 = vunpack.c.l.b16 %v686
    %v1043 = vunpack.c.h.b16 %v686
    %v1044 = vunpack.c.l.b16 %v687
    %v1045 = vunpack.c.h.b16 %v687
    %v1046 = vunpack.c.l.b16 %v688
    %v1047 = vunpack.c.h.b16 %v688
    %v1048 = vunpack.c.l.b16 %v689
    %v1049 = vunpack.c.h.b16 %v689
    %v1050 = vunpack.c.l.b16 %v690
    %v1051 = vunpack.c.h.b16 %v690
    %v1052 = vunpack.c.l.b16 %v691
    %v1053 = vunpack.c.h.b16 %v691
    %v1054 = vunpack.c.l.b16 %v692
    %v1055 = vunpack.c.h.b16 %v692
    %v1056 = vunpack.c.l.b16 %v693
    %v1057 = vunpack.c.h.b16 %v693
    %v1058 = vunpack.c.l.b16 %v694
    %v1059 = vunpack.c.h.b16 %v694
    %v1060 = vunpack.c.l.b16 %v695
    %v1061 = vunpack.c.h.b16 %v695
    %v1062 = vunpack.c.l.b16 %v696
    %v1063 = vunpack.c.h.b16 %v696
    %v1064 = vunpack.c.l.b16 %v697
    %v1065 = vunpack.c.h.b16 %v697
    %v1066 = vunpack.c.l.b16 %v698
    %v1067 = vunpack.c.h.b16 %v698
    %v1068 = vunpack.c.l.b16 %v699
    %v1069 = vunpack.c.h.b16 %v699
    %v1070 = vunpack.c.l.b16 %v700
    %v1071 = vunpack.c.h.b16 %v700
    %v1072 = vunpack.c.l.b16 %v701
    %v1073 = vunpack.c.h.b16 %v701
    %v1074 = vunpack.c.l.b16 %v702
    %v1075 = vunpack.c.h.b16 %v702
    %v1076 = vpack.c.b16 %v1016, %v1012
    %v1077 = vpack.c.b16 %v1017, %v1013
    %v1078 = vpack.c.b16 %v1018, %v1014
    %v1079 = vpack.c.b16 %v1019, %v1015
    %v1080 = vpack.c.b16 %v1024, %v1020
    %v1081 = vpack.c.b16 %v1025, %v1021
    %v1082 = vpack.c.b16 %v1026, %v1022
    %v1083 = vpack.c.b16 %v1027, %v1023
    %v1084 = vpack.c.b16 %v1032, %v1028
    %v1085 = vpack.c.b16 %v1033, %v1029
    %v1086 = vpack.c.b16 %v1034, %v1030
    %v1087 = vpack.c.b16 %v1035, %v1031
    %v1088 = vpack.c.b16 %v1040, %v1036
    %v1089 = vpack.c.b16 %v1041, %v1037
    %v1090 = vpack.c.b16 %v1042, %v1038
    %v1091 = vpack.c.b16 %v1043, %v1039
    %v1092 = vpack.c.b16 %v1048, %v1044
    %v1093 = vpack.c.b16 %v1049, %v1045
    %v1094 = vpack.c.b16 %v1050, %v1046
    %v1095 = vpack.c.b16 %v1051, %v1047
    %v1096 = vpack.c.b16 %v1056, %v1052
    %v1097 = vpack.c.b16 %v1057, %v1053
    %v1098 = vpack.c.b16 %v1058, %v1054
    %v1099 = vpack.c.b16 %v1059, %v1055
    %v1100 = vpack.c.b16 %v1064, %v1060
    %v1101 = vpack.c.b16 %v1065, %v1061
    %v1102 = vpack.c.b16 %v1066, %v1062
    %v1103 = vpack.c.b16 %v1067, %v1063
    %v1104 = vpack.c.b16 %v1072, %v1068
    %v1105 = vpack.c.b16 %v1073, %v1069
    %v1106 = vpack.c.b16 %v1074, %v1070
    %v1107 = vpack.c.b16 %v1075, %v1071
    %1140 = vmatprep.subr.bf16.mxu0 %v1105
    %1141 = vmatpush1.bf16.msra.mxu0 %v1104
    %1142 = vmatprep.subr.bf16.mxu0 %v1101
    %1143 = vmatpush1.bf16.msra.mxu0 %v1100
    %1144 = vmatprep.subr.bf16.mxu0 %v1097
    %1145 = vmatpush1.bf16.msra.mxu0 %v1096
    %1146 = vmatprep.subr.bf16.mxu0 %v1093
    %1147 = vmatpush1.bf16.msra.mxu0 %v1092
    %1148 = vmatprep.subr.bf16.mxu0 %v1089
    %1149 = vmatpush1.bf16.msra.mxu0 %v1088
    %1150 = vmatprep.subr.bf16.mxu0 %v1085
    %1151 = vmatpush1.bf16.msra.mxu0 %v1084
    %1152 = vmatprep.subr.bf16.mxu0 %v1081
    %1153 = vmatpush1.bf16.msra.mxu0 %v1080
    %1154 = vmatprep.subr.bf16.mxu0 %v1077
    %1155 = vmatpush1.bf16.msra.mxu0 %v1076
    %1156 = vmatprep.subr.bf16.mxu0 0
    %1157 = vmatpush2.bf16.msra.mxu0 0
    %1158 = vmatprep.subr.bf16.mxu0 0
    %1159 = vmatpush2.bf16.msra.mxu0 0
    %1160 = vmatprep.subr.bf16.mxu0 0
    %1161 = vmatpush2.bf16.msra.mxu0 0
    %1162 = vmatprep.subr.bf16.mxu0 0
    %1163 = vmatpush2.bf16.msra.mxu0 0
    %1164 = vmatprep.subr.bf16.mxu0 0
    %1165 = vmatpush2.bf16.msra.mxu0 0
    %1166 = vmatprep.subr.bf16.mxu0 0
    %1167 = vmatpush2.bf16.msra.mxu0 0
    %1168 = vmatprep.subr.bf16.mxu0 0
    %1169 = vmatpush2.bf16.msra.mxu0 0
    %1170 = vmatprep.subr.bf16.mxu0 0
    %1171 = vmatpush2.bf16.msra.mxu0 0
    %1172 = vmatprep.mubr.bf16.mxu0 0
    %1173 = vmatmul.mubr.bf16.gmra.mxu0 %v736
    %v1174 = vpop.f32.mrf.mxu0
    %v1175 = vadd.f32 %v933, %v1174
    %v1176 = vpop.f32.mrf.mxu0
    %v1177 = vadd.f32 %v935, %v1176
    %v1178 = vpop.f32.mrf.mxu0
    %v1179 = vpop.f32.mrf.mxu0
    %1180 = vdwg.mxu0
    %1181 = vmatprep.subr.bf16.mxu0 %v1107
    %1182 = vmatpush1.bf16.msra.mxu0 %v1106
    %1183 = vmatprep.subr.bf16.mxu0 %v1103
    %1184 = vmatpush1.bf16.msra.mxu0 %v1102
    %1185 = vmatprep.subr.bf16.mxu0 %v1099
    %1186 = vmatpush1.bf16.msra.mxu0 %v1098
    %1187 = vmatprep.subr.bf16.mxu0 %v1095
    %1188 = vmatpush1.bf16.msra.mxu0 %v1094
    %1189 = vmatprep.subr.bf16.mxu0 %v1091
    %1190 = vmatpush1.bf16.msra.mxu0 %v1090
    %1191 = vmatprep.subr.bf16.mxu0 %v1087
    %1192 = vmatpush1.bf16.msra.mxu0 %v1086
    %1193 = vmatprep.subr.bf16.mxu0 %v1083
    %1194 = vmatpush1.bf16.msra.mxu0 %v1082
    %1195 = vmatprep.subr.bf16.mxu0 %v1079
    %1196 = vmatpush1.bf16.msra.mxu0 %v1078
    %1197 = vmatprep.subr.bf16.mxu0 0
    %1198 = vmatpush2.bf16.msra.mxu0 0
    %1199 = vmatprep.subr.bf16.mxu0 0
    %1200 = vmatpush2.bf16.msra.mxu0 0
    %1201 = vmatprep.subr.bf16.mxu0 0
    %1202 = vmatpush2.bf16.msra.mxu0 0
    %1203 = vmatprep.subr.bf16.mxu0 0
    %1204 = vmatpush2.bf16.msra.mxu0 0
    %1205 = vmatprep.subr.bf16.mxu0 0
    %1206 = vmatpush2.bf16.msra.mxu0 0
    %1207 = vmatprep.subr.bf16.mxu0 0
    %1208 = vmatpush2.bf16.msra.mxu0 0
    %1209 = vmatprep.subr.bf16.mxu0 0
    %1210 = vmatpush2.bf16.msra.mxu0 0
    %1211 = vmatprep.subr.bf16.mxu0 0
    %1212 = vmatpush2.bf16.msra.mxu0 0
    %1213 = vmatprep.mubr.bf16.mxu0 0
    %1214 = vmatmul.mubr.bf16.gmra.mxu0 %v736
    %v1215 = vpop.f32.mrf.mxu0
    %v1216 = vadd.f32 %v974, %v1215
    %v1217 = vpop.f32.mrf.mxu0
    %v1218 = vadd.f32 %v976, %v1217
    %v1219 = vpop.f32.mrf.mxu0
    %v1220 = vpop.f32.mrf.mxu0
    %1221 = vdwg.mxu0
    %s1222 = scalar_lea.vmem %s5, 4
    %v1223 = vld [vmem:[%s1222] sm:$0xf]
    %v1225 = vlaneseq
    %v1226 = vshrl.u32 %v1225, 7
    %v1227 = vsub.s32 0, %v1226
    %v1228 = vrot.slane %v1223, %v1227
    %v1229 = vlaneseq
    %v1230 = vshrl.u32 %v1229, 7
    %v1231 = vsub.s32 1, %v1230
    %v1232 = vrot.slane %v1223, %v1231
    %v1233 = vlaneseq
    %v1234 = vshrl.u32 %v1233, 7
    %v1235 = vsub.s32 2, %v1234
    %v1236 = vrot.slane %v1223, %v1235
    %v1237 = vlaneseq
    %v1238 = vshrl.u32 %v1237, 7
    %v1239 = vsub.s32 3, %v1238
    %v1240 = vrot.slane %v1223, %v1239
    %v1245 = vadd.f32 %v1175, %v1228
    %v1246 = vadd.f32 %v1177, %v1232
    %v1247 = vadd.f32 %v1216, %v1236
    %v1248 = vadd.f32 %v1218, %v1240
    %v1249 = vxor.u32 %v1245, 2147483648
    %v1250 = vmul.f32 %v1249, 1.442695
    %v1251 = vpow.pop %v1250
    %v1252 = vadd.f32 %v1251, 1.0
    %v1253 = vrcp.pop %v1252
    %v1254 = vmul.f32 1.0, %v1253
    %v1255 = vxor.u32 %v1246, 2147483648
    %v1256 = vmul.f32 %v1255, 1.442695
    %v1257 = vpow.pop %v1256
    %v1258 = vadd.f32 %v1257, 1.0
    %v1259 = vrcp.pop %v1258
    %v1260 = vmul.f32 1.0, %v1259
    %v1261 = vtanh.pop %v1247
    %v1262 = vxor.u32 %v1248, 2147483648
    %v1263 = vmul.f32 %v1262, 1.442695
    %v1264 = vpow.pop %v1263
    %v1265 = vadd.f32 %v1264, 1.0
    %v1266 = vrcp.pop %v1265
    %v1267 = vmul.f32 1.0, %v1266
    %v1268 = vmul.f32 %v1260, %v669
    %v1269 = vmul.f32 %v1254, %v1261
    %v1270 = vadd.f32 %v1268, %v1269
    %v1271 = vtanh.pop %v1270
    %v1272 = vmul.f32 %v1267, %v1271
    %s1273 = scalar_lea.vmem %s9, 8
    %1274 = vst [vmem:[%s1273] sm:$0xff] %v1272
    %s1275 = scalar_lea.vmem %s10, 8
    %1276 = vst [vmem:[%s1275] sm:$0xff] %v1270
    %v1277 = vld [vmem:[%s6] sm:$0xf]
    %v1278 = vld [vmem:[%s6 + $0x4] sm:$0xf]
    %v1279 = vld [vmem:[%s6 + $0x8] sm:$0xf]
    %v1280 = vld [vmem:[%s6 + $0xc] sm:$0xf]
    %v1281 = vld [vmem:[%s6 + $0x10] sm:$0xf]
    %v1282 = vld [vmem:[%s6 + $0x14] sm:$0xf]
    %v1283 = vld [vmem:[%s6 + $0x18] sm:$0xf]
    %v1284 = vld [vmem:[%s6 + $0x1c] sm:$0xf]
    %v1285 = vld [vmem:[%s6 + $0x20] sm:$0xf]
    %v1286 = vld [vmem:[%s6 + $0x24] sm:$0xf]
    %v1287 = vld [vmem:[%s6 + $0x28] sm:$0xf]
    %v1288 = vld [vmem:[%s6 + $0x2c] sm:$0xf]
    %v1289 = vld [vmem:[%s6 + $0x30] sm:$0xf]
    %v1290 = vld [vmem:[%s6 + $0x34] sm:$0xf]
    %v1291 = vld [vmem:[%s6 + $0x38] sm:$0xf]
    %v1292 = vld [vmem:[%s6 + $0x3c] sm:$0xf]
    %v1293 = vpack.c.bf16 %v1272, %v1272
    %v1294 = vld [vmem:[%s7] sm:$0x1]
    %v1296 = vlaneseq
    %v1297 = vshrl.u32 %v1296, 7
    %v1298 = vsub.s32 0, %v1297
    %v1299 = vrot.slane %v1294, %v1298
    %v1317 = vunpack.c.l.b16 %v1277
    %v1318 = vunpack.c.l.b16 %v1278
    %v1319 = vunpack.c.l.b16 %v1279
    %v1320 = vunpack.c.l.b16 %v1280
    %v1321 = vunpack.c.l.b16 %v1281
    %v1322 = vunpack.c.l.b16 %v1282
    %v1323 = vunpack.c.l.b16 %v1283
    %v1324 = vunpack.c.l.b16 %v1284
    %v1325 = vunpack.c.l.b16 %v1285
    %v1326 = vunpack.c.l.b16 %v1286
    %v1327 = vunpack.c.l.b16 %v1287
    %v1328 = vunpack.c.l.b16 %v1288
    %v1329 = vunpack.c.l.b16 %v1289
    %v1330 = vunpack.c.l.b16 %v1290
    %v1331 = vunpack.c.l.b16 %v1291
    %v1332 = vunpack.c.l.b16 %v1292
    %v1333 = vpack.c.b16 %v1318, %v1317
    %v1334 = vpack.c.b16 %v1320, %v1319
    %v1335 = vpack.c.b16 %v1322, %v1321
    %v1336 = vpack.c.b16 %v1324, %v1323
    %v1337 = vpack.c.b16 %v1326, %v1325
    %v1338 = vpack.c.b16 %v1328, %v1327
    %v1339 = vpack.c.b16 %v1330, %v1329
    %v1340 = vpack.c.b16 %v1332, %v1331
    %1349 = vmatprep.subr.bf16.mxu0 0
    %1350 = vmatpush1.bf16.msra.mxu0 %v1340
    %1351 = vmatprep.subr.bf16.mxu0 0
    %1352 = vmatpush1.bf16.msra.mxu0 %v1339
    %1353 = vmatprep.subr.bf16.mxu0 0
    %1354 = vmatpush1.bf16.msra.mxu0 %v1338
    %1355 = vmatprep.subr.bf16.mxu0 0
    %1356 = vmatpush1.bf16.msra.mxu0 %v1337
    %1357 = vmatprep.subr.bf16.mxu0 0
    %1358 = vmatpush1.bf16.msra.mxu0 %v1336
    %1359 = vmatprep.subr.bf16.mxu0 0
    %1360 = vmatpush1.bf16.msra.mxu0 %v1335
    %1361 = vmatprep.subr.bf16.mxu0 0
    %1362 = vmatpush1.bf16.msra.mxu0 %v1334
    %1363 = vmatprep.subr.bf16.mxu0 0
    %1364 = vmatpush1.bf16.msra.mxu0 %v1333
    %1365 = vmatprep.subr.bf16.mxu0 0
    %1366 = vmatpush2.bf16.msra.mxu0 0
    %1367 = vmatprep.subr.bf16.mxu0 0
    %1368 = vmatpush2.bf16.msra.mxu0 0
    %1369 = vmatprep.subr.bf16.mxu0 0
    %1370 = vmatpush2.bf16.msra.mxu0 0
    %1371 = vmatprep.subr.bf16.mxu0 0
    %1372 = vmatpush2.bf16.msra.mxu0 0
    %1373 = vmatprep.subr.bf16.mxu0 0
    %1374 = vmatpush2.bf16.msra.mxu0 0
    %1375 = vmatprep.subr.bf16.mxu0 0
    %1376 = vmatpush2.bf16.msra.mxu0 0
    %1377 = vmatprep.subr.bf16.mxu0 0
    %1378 = vmatpush2.bf16.msra.mxu0 0
    %1379 = vmatprep.subr.bf16.mxu0 0
    %1380 = vmatpush2.bf16.msra.mxu0 0
    %1381 = vmatprep.mubr.bf16.mxu0 0
    %1382 = vmatmul.mubr.bf16.gmra.mxu0 %v1293
    %v1383 = vpop.f32.mrf.mxu0
    %v1384 = vadd.f32 %v1299, %v1383
    %v1385 = vpop.f32.mrf.mxu0
    %v1386 = vpop.f32.mrf.mxu0
    %v1387 = vpop.f32.mrf.mxu0
    %1388 = vdwg.mxu0
    %1389 = vst [vmem:[%s8] sm:$0xff] %v1384
    // Predicated region
    $region42: #{rnn_decoder_forward.1} parent=1 // pred_check
      _
    $region43: #{rnn_decoder_forward.1} parent=1 // pred_check_branch
      %1391 = sbr.rel (0) target = $region45
    $region44: #{rnn_decoder_forward.1} parent=1 // pred_region
      _
    $region45: #{rnn_decoder_forward.1} parent=1 // pred_fallthru
      _
    // Predicated region
    $region46: #{rnn_decoder_forward.1} parent=1 // pred_check
      _
    $region47: #{rnn_decoder_forward.1} parent=1 // pred_check_branch
      %1393 = sbr.rel (0) target = $region49
    $region48: #{rnn_decoder_forward.1} parent=1 // pred_region
      _
    $region49: #{rnn_decoder_forward.1} parent=1 // pred_fallthru
      _
    // Predicated region
    $region50: #{rnn_decoder_forward.1} parent=1 // pred_check
      _
    $region51: #{rnn_decoder_forward.1} parent=1 // pred_check_branch
      %1395 = sbr.rel (0) target = $region53
    $region52: #{rnn_decoder_forward.1} parent=1 // pred_region
      _
    $region53: #{rnn_decoder_forward.1} parent=1 // pred_fallthru
      _
    // Predicated region
    $region54: #{rnn_decoder_forward.1} parent=1 // pred_check
      _
    $region55: #{rnn_decoder_forward.1} parent=1 // pred_check_branch
      %1397 = sbr.rel (0) target = $region57
    $region56: #{rnn_decoder_forward.1} parent=1 // pred_region
      _
    $region57: #{rnn_decoder_forward.1} parent=1 // pred_fallthru
      _
    // Predicated region
    $region58: #{rnn_decoder_forward.1} parent=1 // pred_check
      _
    $region59: #{rnn_decoder_forward.1} parent=1 // pred_check_branch
      %1399 = sbr.rel (0) target = $region61
    $region60: #{rnn_decoder_forward.1} parent=1 // pred_region
      _
    $region61: #{rnn_decoder_forward.1} parent=1 // pred_fallthru
      _
    // Predicated region
    $region62: #{rnn_decoder_forward.1} parent=1 // pred_check
      _
    $region63: #{rnn_decoder_forward.1} parent=1 // pred_check_branch
      %1401 = sbr.rel (0) target = $region65
    $region64: #{rnn_decoder_forward.1} parent=1 // pred_region
      _
    $region65: #{rnn_decoder_forward.1} parent=1 // pred_fallthru
      _
    %1402 = vsyncpa [#allocation3], 1
    %1403 = vsyncpa [#allocation5], 1

</llo_original>
